<compile_context>
chip_gen: v6e
topology: v6e:2x2x1
jax: 0.10.0
libtpu: 0.0.40
codegen_flags: <defaults>
</compile_context>

<pallas_src>
import math

import jax
import jax.numpy as jnp
from jax import lax
from jax.experimental import pallas as pl
from jax.experimental.pallas import tpu as pltpu


# --------------------------------- kernel ---------------------------------
def make_block_kernel(H, identity):
    def kernel(x_ref, w1_ref, b1_ref, w2_ref, b2_ref, *rest):
        if identity:
            (out_ref,) = rest
            ws_ref = bs_ref = None
        else:
            ws_ref, bs_ref, out_ref = rest

        xp = x_ref[0].astype(jnp.float32)            # (H+4, W*Cin) rows pre-padded, lane-dense

        # ---- conv1 (3x3, pad=1) + bias + tanh: dx folded into block-tridiagonal weights,
        # 3 accumulating MXU matmuls over dy row slices.  Computed on H+2 rows so the two
        # border rows become conv2's zero row padding after the mask below.
        o1 = jnp.dot(xp[0:H + 2, :], w1_ref[0], preferred_element_type=jnp.float32)
        o1 = o1 + jnp.dot(xp[1:H + 3, :], w1_ref[1], preferred_element_type=jnp.float32)
        o1 = o1 + jnp.dot(xp[2:H + 4, :], w1_ref[2], preferred_element_type=jnp.float32)
        o1 = jnp.tanh(o1 + b1_ref[...])              # (H+2, W*Cout)

        # Zero the two border rows (VPU select, no sublane concatenates): implicit row padding.
        row = lax.broadcasted_iota(jnp.int32, (H + 2, 1), 0)
        keep = (row >= 1) & (row <= H)
        o1 = jnp.where(keep, o1, jnp.zeros_like(o1))

        # ---- conv2 (3x3, pad=1) + bias: same dx-folded form.
        o2 = jnp.dot(o1[0:H, :], w2_ref[0], preferred_element_type=jnp.float32)
        o2 = o2 + jnp.dot(o1[1:H + 1, :], w2_ref[1], preferred_element_type=jnp.float32)
        o2 = o2 + jnp.dot(o1[2:H + 2, :], w2_ref[2], preferred_element_type=jnp.float32)
        o2 = o2 + b2_ref[...]

        # ---- shortcut: identity, or 1x1 projection as one block-diagonal matmul.
        xc = xp[2:H + 2, :]                          # un-padded data rows
        if identity:
            sc = xc
        else:
            sc = jnp.dot(xc, ws_ref[...], preferred_element_type=jnp.float32) + bs_ref[...]

        # ---- residual add + tanh, lane-dense (H, W*Cout) store.
        out_ref[0] = jnp.tanh(o2 + sc).astype(out_ref.dtype)

    return kernel


# --------------------------- wrapper-side weight prep ---------------------------
def _padded_channels(W, C):
    """Smallest C' >= C with (W*C') % 128 == 0, if that costs at most 2x; else C."""
    q = 128 // math.gcd(W, 128)
    Cp = -(-C // q) * q
    return Cp if Cp <= 2 * C else C


def _dx_folded_conv_weights(w, W):
    """w: (9, Ci, Co), taps in (dy, dx) row-major order -> (3, W*Ci, W*Co).

    W_dy = sum_dx kron(S_dx, w[dy, dx]) with S_dx[i, j] = 1 iff i - j == dx - 1 (shifted
    identity).  The dropped out-of-range columns implement zero padding along W, so no lane
    padding of the activations is needed.
    """
    _, Ci, Co = w.shape
    w = w.reshape(3, 3, Ci, Co)
    mats = []
    for dy in range(3):
        m = jnp.zeros((W, Ci, W, Co), w.dtype)
        for dx in range(3):
            s = jnp.eye(W, k=1 - dx, dtype=w.dtype)
            m = m + jnp.einsum("ij,cd->icjd", s, w[dy, dx])
        mats.append(m.reshape(W * Ci, W * Co))
    return jnp.stack(mats, axis=0)


def _diag_proj_weights(ws, W):
    """ws: (Ci, Co) 1x1 projection -> (W*Ci, W*Co) block-diagonal kron(I_W, ws)."""
    return jnp.einsum("ij,cd->icjd", jnp.eye(W, dtype=ws.dtype), ws).reshape(
        W * ws.shape[0], W * ws.shape[1])


# --------------------------------- wrapper ---------------------------------
def basic_block_no_bn(x, params, stride=1):
    """x: (N, H, W, Cin) float32 NHWC (PyTorch NCHW input is transposed beforehand)."""
    if stride != 1:
        # TODO(synk): strided (downsampling) basic block not implemented in this kernel.
        raise NotImplementedError("stride != 1 not supported by this Pallas kernel")

    N, H, W, Cin = x.shape
    w1, b1, w2, b2 = params["w1"], params["b1"], params["w2"], params["b2"]
    Cout = w1.shape[-1]
    identity = "ws" not in params
    assert identity == (Cin == Cout), "projection shortcut required iff Cin != Cout (stride=1)"

    # Channel padding so the fused (w, c) lane axis is a multiple of 128 (lane-dense I/O).
    Cin_p = _padded_channels(W, Cin)
    Cout_p = _padded_channels(W, Cout)

    # Pad rows once in the wrapper (2 zero rows each side) and fuse (w, c) onto lanes.
    xp = jnp.pad(x, ((0, 0), (2, 2), (0, 0), (0, Cin_p - Cin)))
    xp = xp.reshape(N, H + 4, W * Cin_p)

    def pad_w(w, ci, co):
        return jnp.pad(w, ((0, 0), (0, ci - w.shape[1]), (0, co - w.shape[2])))

    w1_s = _dx_folded_conv_weights(pad_w(w1, Cin_p, Cout_p), W)    # (3, W*Cin_p,  W*Cout_p)
    w2_s = _dx_folded_conv_weights(pad_w(w2, Cout_p, Cout_p), W)   # (3, W*Cout_p, W*Cout_p)
    b1_t = jnp.tile(jnp.pad(b1, ((0, 0), (0, Cout_p - Cout))), (1, W))
    b2_t = jnp.tile(jnp.pad(b2, ((0, 0), (0, Cout_p - Cout))), (1, W))

    const_arrays = [w1_s, b1_t, w2_s, b2_t]
    if not identity:
        ws_p = jnp.pad(params["ws"], ((0, Cin_p - Cin), (0, Cout_p - Cout)))
        bs_p = jnp.pad(params["bs"], ((0, 0), (0, Cout_p - Cout)))
        const_arrays += [_diag_proj_weights(ws_p, W), jnp.tile(bs_p, (1, W))]

    kernel = make_block_kernel(H, identity)
    out_shape = jax.ShapeDtypeStruct((N, H, W * Cout_p), x.dtype)

    # VMEM budget from actual operand sizes (x/out double-buffered, constants single-buffered),
    # clamped to [32 MiB, 64 MiB] so it stays inside v7x's 64 MiB physical VMEM.
    stream_bytes = 2 * 4 * ((H + 4) * W * Cin_p + H * W * Cout_p)
    const_bytes = sum(int(a.size) * 4 for a in const_arrays)
    vmem_limit = int(min(64 * 2 ** 20, max(32 * 2 ** 20, 2 * (stream_bytes + const_bytes))))

    def call(buffer_constants_once):
        x_spec = pl.BlockSpec((1, H + 4, W * Cin_p), lambda n: (n, 0, 0))
        out_spec = pl.BlockSpec((1, H, W * Cout_p), lambda n: (n, 0, 0))

        def const_spec(a):
            shape = tuple(a.shape)
            idx = lambda n: (0,) * len(shape)
            if buffer_constants_once:
                # Grid-invariant operand: single-buffer it (no point double-buffering).
                return pl.BlockSpec(shape, idx, pipeline_mode=pl.Buffered(1))
            return pl.BlockSpec(shape, idx)

        in_specs = [x_spec] + [const_spec(a) for a in const_arrays]
        return pl.pallas_call(
            kernel,
            out_shape=out_shape,
            grid_spec=pltpu.PrefetchScalarGridSpec(
                num_scalar_prefetch=0,
                grid=(N,),   # keep >= 2 parallel steps: one image per TensorCore on v7x
                in_specs=in_specs,
                out_specs=out_spec,
            ),
            compiler_params=pltpu.CompilerParams(
                dimension_semantics=("parallel",),
                vmem_limit_bytes=vmem_limit,
            ),
        )(xp, *const_arrays)

    try:
        out_f = call(buffer_constants_once=True)
    except Exception:
        # Fallback if this Pallas version rejects pipeline_mode=pl.Buffered(1).
        out_f = call(buffer_constants_once=False)

    out = out_f.reshape(N, H, W, Cout_p)
    return out[..., :Cout]


# ----------------------- pure-JAX reference (for sanity) -----------------------
def _conv_ref(x, w_hwio, b):
    y = lax.conv_general_dilated(
        x, w_hwio, window_strides=(1, 1), padding="SAME",
        dimension_numbers=("NHWC", "HWIO", "NHWC"))
    return y + b.reshape(1, 1, 1, -1)


def ref_block(x, params):
    Cin = x.shape[-1]
    Cout = params["w1"].shape[-1]
    o = jnp.tanh(_conv_ref(x, params["w1"].reshape(3, 3, Cin, Cout), params["b1"]))
    o = _conv_ref(o, params["w2"].reshape(3, 3, Cout, Cout), params["b2"])
    if "ws" in params:
        sc = _conv_ref(x, params["ws"].reshape(1, 1, Cin, Cout), params["bs"])
    else:
        sc = x
    return jnp.tanh(o + sc)


def init_params(key, in_planes, planes):
    ks = jax.random.split(key, 6)
    params = {
        "w1": 0.1 * jax.random.normal(ks[0], (9, in_planes, planes), jnp.float32),
        "b1": 0.1 * jax.random.normal(ks[1], (1, planes), jnp.float32),
        "w2": 0.1 * jax.random.normal(ks[2], (9, planes, planes), jnp.float32),
        "b2": 0.1 * jax.random.normal(ks[3], (1, planes), jnp.float32),
    }
    if in_planes != planes:  # projection shortcut (1x1 conv), stride=1 case
        params["ws"] = 0.1 * jax.random.normal(ks[4], (in_planes, planes), jnp.float32)
        params["bs"] = 0.1 * jax.random.normal(ks[5], (1, planes), jnp.float32)
    return params


if __name__ == "__main__":
    key = jax.random.PRNGKey(0)
    kx, kp1, kp2 = jax.random.split(key, 3)

    # PyTorch-style NCHW input (2, 4, 16, 16) -> NHWC for the kernel (layout plumbing only).
    N, C, H, W = 2, 4, 16, 16
    x_nchw = jax.random.normal(kx, (N, C, H, W), jnp.float32)
    x = jnp.transpose(x_nchw, (0, 2, 3, 1))

    # Case 1: identity shortcut (in_planes == planes, stride=1).
    p_id = init_params(kp1, 4, 4)
    out_id = jax.block_until_ready(basic_block_no_bn(x, p_id, stride=1))
    ref_id = ref_block(x, p_id)
    assert out_id.shape == (N, H, W, 4)
    assert jnp.allclose(out_id, ref_id, atol=1e-4, rtol=1e-4), \
        float(jnp.max(jnp.abs(out_id - ref_id)))

    # Case 2: projection shortcut (in_planes != planes, stride=1).
    p_proj = init_params(kp2, 4, 8)
    out_proj = jax.block_until_ready(basic_block_no_bn(x, p_proj, stride=1))
    ref_proj = ref_block(x, p_proj)
    assert out_proj.shape == (N, H, W, 8)
    assert jnp.allclose(out_proj, ref_proj, atol=1e-4, rtol=1e-4), \
        float(jnp.max(jnp.abs(out_proj - ref_proj)))

    print("KERNEL_OK")
</pallas_src>

<mosaic_0001>
module attributes {stable_mosaic.version = 11 : i64} {
  func.func @kernel(%arg0: i32, %arg1: memref<1x20x128xf32, #tpu.memory_space<vmem>>, %arg2: memref<3x128x128xf32, #tpu.memory_space<vmem>>, %arg3: memref<1x128xf32, #tpu.memory_space<vmem>>, %arg4: memref<3x128x128xf32, #tpu.memory_space<vmem>>, %arg5: memref<1x128xf32, #tpu.memory_space<vmem>>, %arg6: memref<1x16x128xf32, #tpu.memory_space<vmem>>) attributes {dimension_semantics = [#tpu.dimension_semantics<parallel>], iteration_bounds = array<i64: 2>, scalar_prefetch = 0 : i64, scratch_operands = 0 : i64, tpu.core_type = #tpu.core_type<tc>, window_params = [{transform_indices = @transform_0, window_bounds = array<i64: 1, 20, 128>}, {pipeline_mode = #tpu.pipeline_mode<synchronous>, transform_indices = @transform_1, window_bounds = array<i64: 3, 128, 128>}, {pipeline_mode = #tpu.pipeline_mode<synchronous>, transform_indices = @transform_2, window_bounds = array<i64: 1, 128>}, {pipeline_mode = #tpu.pipeline_mode<synchronous>, transform_indices = @transform_3, window_bounds = array<i64: 3, 128, 128>}, {pipeline_mode = #tpu.pipeline_mode<synchronous>, transform_indices = @transform_4, window_bounds = array<i64: 1, 128>}, {transform_indices = @transform_5, window_bounds = array<i64: 1, 16, 128>}]} {
    %c0 = arith.constant 0 : index
    %c0_0 = arith.constant 0 : index
    %c0_1 = arith.constant 0 : index
    %0 = vector.load %arg1[%c0, %c0_0, %c0_1] : memref<1x20x128xf32, #tpu.memory_space<vmem>>, vector<1x20x128xf32>
    %1 = vector.shape_cast %0 : vector<1x20x128xf32> to vector<20x128xf32>
    %2 = vector.extract_strided_slice %1 {offsets = [0, 0], sizes = [18, 128], strides = [1, 1]} : vector<20x128xf32> to vector<18x128xf32>
    %c0_2 = arith.constant 0 : index
    %c0_3 = arith.constant 0 : index
    %c0_4 = arith.constant 0 : index
    %3 = vector.load %arg2[%c0_2, %c0_3, %c0_4] : memref<3x128x128xf32, #tpu.memory_space<vmem>>, vector<1x128x128xf32>
    %4 = vector.shape_cast %3 : vector<1x128x128xf32> to vector<128x128xf32>
    %cst = arith.constant dense<0.000000e+00> : vector<18x128xf32>
    %5 = tpu.matmul %2, %4, %cst {dimension_numbers = #tpu.dot_dimension_numbers<[1], [0], [0], [1], [0, 0, 1, 1], [], []>} : vector<18x128xf32>, vector<128x128xf32>, vector<18x128xf32> -> vector<18x128xf32>
    %6 = vector.extract_strided_slice %1 {offsets = [1, 0], sizes = [18, 128], strides = [1, 1]} : vector<20x128xf32> to vector<18x128xf32>
    %c1 = arith.constant 1 : index
    %c0_5 = arith.constant 0 : index
    %c0_6 = arith.constant 0 : index
    %7 = vector.load %arg2[%c1, %c0_5, %c0_6] : memref<3x128x128xf32, #tpu.memory_space<vmem>>, vector<1x128x128xf32>
    %8 = vector.shape_cast %7 : vector<1x128x128xf32> to vector<128x128xf32>
    %cst_7 = arith.constant dense<0.000000e+00> : vector<18x128xf32>
    %9 = tpu.matmul %6, %8, %cst_7 {dimension_numbers = #tpu.dot_dimension_numbers<[1], [0], [0], [1], [0, 0, 1, 1], [], []>} : vector<18x128xf32>, vector<128x128xf32>, vector<18x128xf32> -> vector<18x128xf32>
    %10 = arith.addf %5, %9 : vector<18x128xf32>
    %11 = vector.extract_strided_slice %1 {offsets = [2, 0], sizes = [18, 128], strides = [1, 1]} : vector<20x128xf32> to vector<18x128xf32>
    %c2 = arith.constant 2 : index
    %c0_8 = arith.constant 0 : index
    %c0_9 = arith.constant 0 : index
    %12 = vector.load %arg2[%c2, %c0_8, %c0_9] : memref<3x128x128xf32, #tpu.memory_space<vmem>>, vector<1x128x128xf32>
    %13 = vector.shape_cast %12 : vector<1x128x128xf32> to vector<128x128xf32>
    %cst_10 = arith.constant dense<0.000000e+00> : vector<18x128xf32>
    %14 = tpu.matmul %11, %13, %cst_10 {dimension_numbers = #tpu.dot_dimension_numbers<[1], [0], [0], [1], [0, 0, 1, 1], [], []>} : vector<18x128xf32>, vector<128x128xf32>, vector<18x128xf32> -> vector<18x128xf32>
    %15 = arith.addf %10, %14 : vector<18x128xf32>
    %c0_11 = arith.constant 0 : index
    %c0_12 = arith.constant 0 : index
    %16 = vector.load %arg3[%c0_11, %c0_12] : memref<1x128xf32, #tpu.memory_space<vmem>>, vector<1x128xf32>
    %17 = vector.broadcast %16 : vector<1x128xf32> to vector<18x128xf32>
    %18 = arith.addf %15, %17 : vector<18x128xf32>
    %19 = math.tanh %18 : vector<18x128xf32>
    %20 = tpu.iota {dimensions = array<i32: 0>} : vector<18x1xi32>
    %c1_i32 = arith.constant 1 : i32
    %21 = vector.broadcast %c1_i32 : i32 to vector<18x1xi32>
    %22 = arith.cmpi sge, %20, %21 : vector<18x1xi32>
    %c16_i32 = arith.constant 16 : i32
    %23 = vector.broadcast %c16_i32 : i32 to vector<18x1xi32>
    %24 = arith.cmpi sle, %20, %23 : vector<18x1xi32>
    %25 = arith.andi %22, %24 : vector<18x1xi1>
    %cst_13 = arith.constant 0.000000e+00 : f32
    %26 = vector.broadcast %cst_13 : f32 to vector<18x128xf32>
    %27 = vector.shape_cast %25 : vector<18x1xi1> to vector<18x1xi1>
    %28 = vector.broadcast %27 : vector<18x1xi1> to vector<18x128xi1>
    %29 = arith.select %28, %19, %26 : vector<18x128xi1>, vector<18x128xf32>
    %30 = vector.extract_strided_slice %29 {offsets = [0, 0], sizes = [16, 128], strides = [1, 1]} : vector<18x128xf32> to vector<16x128xf32>
    %c0_14 = arith.constant 0 : index
    %c0_15 = arith.constant 0 : index
    %c0_16 = arith.constant 0 : index
    %31 = vector.load %arg4[%c0_14, %c0_15, %c0_16] : memref<3x128x128xf32, #tpu.memory_space<vmem>>, vector<1x128x128xf32>
    %32 = vector.shape_cast %31 : vector<1x128x128xf32> to vector<128x128xf32>
    %cst_17 = arith.constant dense<0.000000e+00> : vector<16x128xf32>
    %33 = tpu.matmul %30, %32, %cst_17 {dimension_numbers = #tpu.dot_dimension_numbers<[1], [0], [0], [1], [0, 0, 1, 1], [], []>} : vector<16x128xf32>, vector<128x128xf32>, vector<16x128xf32> -> vector<16x128xf32>
    %34 = vector.extract_strided_slice %29 {offsets = [1, 0], sizes = [16, 128], strides = [1, 1]} : vector<18x128xf32> to vector<16x128xf32>
    %c1_18 = arith.constant 1 : index
    %c0_19 = arith.constant 0 : index
    %c0_20 = arith.constant 0 : index
    %35 = vector.load %arg4[%c1_18, %c0_19, %c0_20] : memref<3x128x128xf32, #tpu.memory_space<vmem>>, vector<1x128x128xf32>
    %36 = vector.shape_cast %35 : vector<1x128x128xf32> to vector<128x128xf32>
    %cst_21 = arith.constant dense<0.000000e+00> : vector<16x128xf32>
    %37 = tpu.matmul %34, %36, %cst_21 {dimension_numbers = #tpu.dot_dimension_numbers<[1], [0], [0], [1], [0, 0, 1, 1], [], []>} : vector<16x128xf32>, vector<128x128xf32>, vector<16x128xf32> -> vector<16x128xf32>
    %38 = arith.addf %33, %37 : vector<16x128xf32>
    %39 = vector.extract_strided_slice %29 {offsets = [2, 0], sizes = [16, 128], strides = [1, 1]} : vector<18x128xf32> to vector<16x128xf32>
    %c2_22 = arith.constant 2 : index
    %c0_23 = arith.constant 0 : index
    %c0_24 = arith.constant 0 : index
    %40 = vector.load %arg4[%c2_22, %c0_23, %c0_24] : memref<3x128x128xf32, #tpu.memory_space<vmem>>, vector<1x128x128xf32>
    %41 = vector.shape_cast %40 : vector<1x128x128xf32> to vector<128x128xf32>
    %cst_25 = arith.constant dense<0.000000e+00> : vector<16x128xf32>
    %42 = tpu.matmul %39, %41, %cst_25 {dimension_numbers = #tpu.dot_dimension_numbers<[1], [0], [0], [1], [0, 0, 1, 1], [], []>} : vector<16x128xf32>, vector<128x128xf32>, vector<16x128xf32> -> vector<16x128xf32>
    %43 = arith.addf %38, %42 : vector<16x128xf32>
    %c0_26 = arith.constant 0 : index
    %c0_27 = arith.constant 0 : index
    %44 = vector.load %arg5[%c0_26, %c0_27] : memref<1x128xf32, #tpu.memory_space<vmem>>, vector<1x128xf32>
    %45 = vector.broadcast %44 : vector<1x128xf32> to vector<16x128xf32>
    %46 = arith.addf %43, %45 : vector<16x128xf32>
    %47 = vector.extract_strided_slice %1 {offsets = [2, 0], sizes = [16, 128], strides = [1, 1]} : vector<20x128xf32> to vector<16x128xf32>
    %48 = arith.addf %46, %47 : vector<16x128xf32>
    %49 = math.tanh %48 : vector<16x128xf32>
    %c0_28 = arith.constant 0 : index
    %c0_29 = arith.constant 0 : index
    %c0_30 = arith.constant 0 : index
    %50 = vector.load %arg6[%c0_28, %c0_29, %c0_30] : memref<1x16x128xf32, #tpu.memory_space<vmem>>, vector<1x16x128xf32>
    %51 = vector.shape_cast %50 : vector<1x16x128xf32> to vector<16x128xf32>
    %52 = vector.shape_cast %49 : vector<16x128xf32> to vector<1x16x128xf32>
    tpu.vector_store %arg6[%c0_28, %c0_29, %c0_30], %52 {strides = array<i32>} : memref<1x16x128xf32, #tpu.memory_space<vmem>>, vector<1x16x128xf32>,
    return
  }
  func.func @transform_0(%arg0: i32) -> (i32, i32, i32) {
    %c0_i32 = arith.constant 0 : i32
    %c0_i32_0 = arith.constant 0 : i32
    %c0_i32_1 = arith.constant 0 : i32
    return %arg0, %c0_i32, %c0_i32_0 : i32, i32, i32
  }
  func.func @transform_1(%arg0: i32) -> (i32, i32, i32) {
    %c0_i32 = arith.constant 0 : i32
    %c0_i32_0 = arith.constant 0 : i32
    %c0_i32_1 = arith.constant 0 : i32
    %c0_i32_2 = arith.constant 0 : i32
    return %c0_i32, %c0_i32_0, %c0_i32_1 : i32, i32, i32
  }
  func.func @transform_2(%arg0: i32) -> (i32, i32) {
    %c0_i32 = arith.constant 0 : i32
    %c0_i32_0 = arith.constant 0 : i32
    %c0_i32_1 = arith.constant 0 : i32
    return %c0_i32, %c0_i32_0 : i32, i32
  }
  func.func @transform_3(%arg0: i32) -> (i32, i32, i32) {
    %c0_i32 = arith.constant 0 : i32
    %c0_i32_0 = arith.constant 0 : i32
    %c0_i32_1 = arith.constant 0 : i32
    %c0_i32_2 = arith.constant 0 : i32
    return %c0_i32, %c0_i32_0, %c0_i32_1 : i32, i32, i32
  }
  func.func @transform_4(%arg0: i32) -> (i32, i32) {
    %c0_i32 = arith.constant 0 : i32
    %c0_i32_0 = arith.constant 0 : i32
    %c0_i32_1 = arith.constant 0 : i32
    return %c0_i32, %c0_i32_0 : i32, i32
  }
  func.func @transform_5(%arg0: i32) -> (i32, i32, i32) {
    %c0_i32 = arith.constant 0 : i32
    %c0_i32_0 = arith.constant 0 : i32
    %c0_i32_1 = arith.constant 0 : i32
    return %arg0, %c0_i32, %c0_i32_0 : i32, i32, i32
  }
}

module attributes {stable_mosaic.version = 11 : i64} {
  func.func @kernel(%arg0: i32, %arg1: memref<1x20x128xf32, #tpu.memory_space<vmem>>, %arg2: memref<3x128x128xf32, #tpu.memory_space<vmem>>, %arg3: memref<1x128xf32, #tpu.memory_space<vmem>>, %arg4: memref<3x128x128xf32, #tpu.memory_space<vmem>>, %arg5: memref<1x128xf32, #tpu.memory_space<vmem>>, %arg6: memref<1x16x128xf32, #tpu.memory_space<vmem>>) attributes {dimension_semantics = [#tpu.dimension_semantics<parallel>], iteration_bounds = array<i64: 2>, scalar_prefetch = 0 : i64, scratch_operands = 0 : i64, tpu.core_type = #tpu.core_type<tc>, window_params = [{transform_indices = @transform_0, window_bounds = array<i64: 1, 20, 128>}, {pipeline_mode = #tpu.pipeline_mode<synchronous>, transform_indices = @transform_1, window_bounds = array<i64: 3, 128, 128>}, {pipeline_mode = #tpu.pipeline_mode<synchronous>, transform_indices = @transform_2, window_bounds = array<i64: 1, 128>}, {pipeline_mode = #tpu.pipeline_mode<synchronous>, transform_indices = @transform_3, window_bounds = array<i64: 3, 128, 128>}, {pipeline_mode = #tpu.pipeline_mode<synchronous>, transform_indices = @transform_4, window_bounds = array<i64: 1, 128>}, {transform_indices = @transform_5, window_bounds = array<i64: 1, 16, 128>}]} {
    %c0 = arith.constant 0 : index
    %c0_0 = arith.constant 0 : index
    %c0_1 = arith.constant 0 : index
    %0 = vector.load %arg1[%c0, %c0_0, %c0_1] : memref<1x20x128xf32, #tpu.memory_space<vmem>>, vector<1x20x128xf32>
    %1 = vector.shape_cast %0 : vector<1x20x128xf32> to vector<20x128xf32>
    %2 = vector.extract_strided_slice %1 {offsets = [0, 0], sizes = [18, 128], strides = [1, 1]} : vector<20x128xf32> to vector<18x128xf32>
    %c0_2 = arith.constant 0 : index
    %c0_3 = arith.constant 0 : index
    %c0_4 = arith.constant 0 : index
    %3 = vector.load %arg2[%c0_2, %c0_3, %c0_4] : memref<3x128x128xf32, #tpu.memory_space<vmem>>, vector<1x128x128xf32>
    %4 = vector.shape_cast %3 : vector<1x128x128xf32> to vector<128x128xf32>
    %cst = arith.constant dense<0.000000e+00> : vector<18x128xf32>
    %5 = tpu.matmul %2, %4, %cst {dimension_numbers = #tpu.dot_dimension_numbers<[1], [0], [0], [1], [0, 0, 1, 1], [], []>} : vector<18x128xf32>, vector<128x128xf32>, vector<18x128xf32> -> vector<18x128xf32>
    %6 = vector.extract_strided_slice %1 {offsets = [1, 0], sizes = [18, 128], strides = [1, 1]} : vector<20x128xf32> to vector<18x128xf32>
    %c1 = arith.constant 1 : index
    %c0_5 = arith.constant 0 : index
    %c0_6 = arith.constant 0 : index
    %7 = vector.load %arg2[%c1, %c0_5, %c0_6] : memref<3x128x128xf32, #tpu.memory_space<vmem>>, vector<1x128x128xf32>
    %8 = vector.shape_cast %7 : vector<1x128x128xf32> to vector<128x128xf32>
    %cst_7 = arith.constant dense<0.000000e+00> : vector<18x128xf32>
    %9 = tpu.matmul %6, %8, %cst_7 {dimension_numbers = #tpu.dot_dimension_numbers<[1], [0], [0], [1], [0, 0, 1, 1], [], []>} : vector<18x128xf32>, vector<128x128xf32>, vector<18x128xf32> -> vector<18x128xf32>
    %10 = arith.addf %5, %9 : vector<18x128xf32>
    %11 = vector.extract_strided_slice %1 {offsets = [2, 0], sizes = [18, 128], strides = [1, 1]} : vector<20x128xf32> to vector<18x128xf32>
    %c2 = arith.constant 2 : index
    %c0_8 = arith.constant 0 : index
    %c0_9 = arith.constant 0 : index
    %12 = vector.load %arg2[%c2, %c0_8, %c0_9] : memref<3x128x128xf32, #tpu.memory_space<vmem>>, vector<1x128x128xf32>
    %13 = vector.shape_cast %12 : vector<1x128x128xf32> to vector<128x128xf32>
    %cst_10 = arith.constant dense<0.000000e+00> : vector<18x128xf32>
    %14 = tpu.matmul %11, %13, %cst_10 {dimension_numbers = #tpu.dot_dimension_numbers<[1], [0], [0], [1], [0, 0, 1, 1], [], []>} : vector<18x128xf32>, vector<128x128xf32>, vector<18x128xf32> -> vector<18x128xf32>
    %15 = arith.addf %10, %14 : vector<18x128xf32>
    %c0_11 = arith.constant 0 : index
    %c0_12 = arith.constant 0 : index
    %16 = vector.load %arg3[%c0_11, %c0_12] : memref<1x128xf32, #tpu.memory_space<vmem>>, vector<1x128xf32>
    %17 = vector.broadcast %16 : vector<1x128xf32> to vector<18x128xf32>
    %18 = arith.addf %15, %17 : vector<18x128xf32>
    %19 = math.tanh %18 : vector<18x128xf32>
    %20 = tpu.iota {dimensions = array<i32: 0>} : vector<18x1xi32>
    %c1_i32 = arith.constant 1 : i32
    %21 = vector.broadcast %c1_i32 : i32 to vector<18x1xi32>
    %22 = arith.cmpi sge, %20, %21 : vector<18x1xi32>
    %c16_i32 = arith.constant 16 : i32
    %23 = vector.broadcast %c16_i32 : i32 to vector<18x1xi32>
    %24 = arith.cmpi sle, %20, %23 : vector<18x1xi32>
    %25 = arith.andi %22, %24 : vector<18x1xi1>
    %cst_13 = arith.constant 0.000000e+00 : f32
    %26 = vector.broadcast %cst_13 : f32 to vector<18x128xf32>
    %27 = vector.shape_cast %25 : vector<18x1xi1> to vector<18x1xi1>
    %28 = vector.broadcast %27 : vector<18x1xi1> to vector<18x128xi1>
    %29 = arith.select %28, %19, %26 : vector<18x128xi1>, vector<18x128xf32>
    %30 = vector.extract_strided_slice %29 {offsets = [0, 0], sizes = [16, 128], strides = [1, 1]} : vector<18x128xf32> to vector<16x128xf32>
    %c0_14 = arith.constant 0 : index
    %c0_15 = arith.constant 0 : index
    %c0_16 = arith.constant 0 : index
    %31 = vector.load %arg4[%c0_14, %c0_15, %c0_16] : memref<3x128x128xf32, #tpu.memory_space<vmem>>, vector<1x128x128xf32>
    %32 = vector.shape_cast %31 : vector<1x128x128xf32> to vector<128x128xf32>
    %cst_17 = arith.constant dense<0.000000e+00> : vector<16x128xf32>
    %33 = tpu.matmul %30, %32, %cst_17 {dimension_numbers = #tpu.dot_dimension_numbers<[1], [0], [0], [1], [0, 0, 1, 1], [], []>} : vector<16x128xf32>, vector<128x128xf32>, vector<16x128xf32> -> vector<16x128xf32>
    %34 = vector.extract_strided_slice %29 {offsets = [1, 0], sizes = [16, 128], strides = [1, 1]} : vector<18x128xf32> to vector<16x128xf32>
    %c1_18 = arith.constant 1 : index
    %c0_19 = arith.constant 0 : index
    %c0_20 = arith.constant 0 : index
    %35 = vector.load %arg4[%c1_18, %c0_19, %c0_20] : memref<3x128x128xf32, #tpu.memory_space<vmem>>, vector<1x128x128xf32>
    %36 = vector.shape_cast %35 : vector<1x128x128xf32> to vector<128x128xf32>
    %cst_21 = arith.constant dense<0.000000e+00> : vector<16x128xf32>
    %37 = tpu.matmul %34, %36, %cst_21 {dimension_numbers = #tpu.dot_dimension_numbers<[1], [0], [0], [1], [0, 0, 1, 1], [], []>} : vector<16x128xf32>, vector<128x128xf32>, vector<16x128xf32> -> vector<16x128xf32>
    %38 = arith.addf %33, %37 : vector<16x128xf32>
    %39 = vector.extract_strided_slice %29 {offsets = [2, 0], sizes = [16, 128], strides = [1, 1]} : vector<18x128xf32> to vector<16x128xf32>
    %c2_22 = arith.constant 2 : index
    %c0_23 = arith.constant 0 : index
    %c0_24 = arith.constant 0 : index
    %40 = vector.load %arg4[%c2_22, %c0_23, %c0_24] : memref<3x128x128xf32, #tpu.memory_space<vmem>>, vector<1x128x128xf32>
    %41 = vector.shape_cast %40 : vector<1x128x128xf32> to vector<128x128xf32>
    %cst_25 = arith.constant dense<0.000000e+00> : vector<16x128xf32>
    %42 = tpu.matmul %39, %41, %cst_25 {dimension_numbers = #tpu.dot_dimension_numbers<[1], [0], [0], [1], [0, 0, 1, 1], [], []>} : vector<16x128xf32>, vector<128x128xf32>, vector<16x128xf32> -> vector<16x128xf32>
    %43 = arith.addf %38, %42 : vector<16x128xf32>
    %c0_26 = arith.constant 0 : index
    %c0_27 = arith.constant 0 : index
    %44 = vector.load %arg5[%c0_26, %c0_27] : memref<1x128xf32, #tpu.memory_space<vmem>>, vector<1x128xf32>
    %45 = vector.broadcast %44 : vector<1x128xf32> to vector<16x128xf32>
    %46 = arith.addf %43, %45 : vector<16x128xf32>
    %47 = vector.extract_strided_slice %1 {offsets = [2, 0], sizes = [16, 128], strides = [1, 1]} : vector<20x128xf32> to vector<16x128xf32>
    %48 = arith.addf %46, %47 : vector<16x128xf32>
    %49 = math.tanh %48 : vector<16x128xf32>
    %c0_28 = arith.constant 0 : index
    %c0_29 = arith.constant 0 : index
    %c0_30 = arith.constant 0 : index
    %50 = vector.load %arg6[%c0_28, %c0_29, %c0_30] : memref<1x16x128xf32, #tpu.memory_space<vmem>>, vector<1x16x128xf32>
    %51 = vector.shape_cast %50 : vector<1x16x128xf32> to vector<16x128xf32>
    %52 = vector.shape_cast %49 : vector<16x128xf32> to vector<1x16x128xf32>
    tpu.vector_store %arg6[%c0_28, %c0_29, %c0_30], %52 {strides = array<i32>} : memref<1x16x128xf32, #tpu.memory_space<vmem>>, vector<1x16x128xf32>,
    return
  }
  func.func @transform_0(%arg0: i32) -> (i32, i32, i32) {
    %c0_i32 = arith.constant 0 : i32
    %c0_i32_0 = arith.constant 0 : i32
    %c0_i32_1 = arith.constant 0 : i32
    return %arg0, %c0_i32, %c0_i32_0 : i32, i32, i32
  }
  func.func @transform_1(%arg0: i32) -> (i32, i32, i32) {
    %c0_i32 = arith.constant 0 : i32
    %c0_i32_0 = arith.constant 0 : i32
    %c0_i32_1 = arith.constant 0 : i32
    %c0_i32_2 = arith.constant 0 : i32
    return %c0_i32, %c0_i32_0, %c0_i32_1 : i32, i32, i32
  }
  func.func @transform_2(%arg0: i32) -> (i32, i32) {
    %c0_i32 = arith.constant 0 : i32
    %c0_i32_0 = arith.constant 0 : i32
    %c0_i32_1 = arith.constant 0 : i32
    return %c0_i32, %c0_i32_0 : i32, i32
  }
  func.func @transform_3(%arg0: i32) -> (i32, i32, i32) {
    %c0_i32 = arith.constant 0 : i32
    %c0_i32_0 = arith.constant 0 : i32
    %c0_i32_1 = arith.constant 0 : i32
    %c0_i32_2 = arith.constant 0 : i32
    return %c0_i32, %c0_i32_0, %c0_i32_1 : i32, i32, i32
  }
  func.func @transform_4(%arg0: i32) -> (i32, i32) {
    %c0_i32 = arith.constant 0 : i32
    %c0_i32_0 = arith.constant 0 : i32
    %c0_i32_1 = arith.constant 0 : i32
    return %c0_i32, %c0_i32_0 : i32, i32
  }
  func.func @transform_5(%arg0: i32) -> (i32, i32, i32) {
    %c0_i32 = arith.constant 0 : i32
    %c0_i32_0 = arith.constant 0 : i32
    %c0_i32_1 = arith.constant 0 : i32
    return %arg0, %c0_i32, %c0_i32_0 : i32, i32, i32
  }
}

</mosaic_0001>

<llo_original>
// kernel: tpu_custom_call.1
$region0: #{tpu_custom_call.1}
  #allocation0 [shape = 'u32[]', space=smem, size = 0x4, offset = 0x4, fixed_abs, tag = 'smem constant byte address 0x4 - core index']
  #allocation1 [shape = 'u32[144,128]{1,0:T(1,128)}', space=vmem, size = 0x12000, scoped, tag = 'internal scratch']
  %s0 = inlined_call_operand.vmem [shape: f32[2,20,128], index: 0, kind: input, shape index: {}]
  %s1 = inlined_call_operand.hbm [shape: f32[3,128,128], index: 1, kind: input, shape index: {}]
  %s2 = inlined_call_operand.vmem [shape: f32[1,128], index: 2, kind: input, shape index: {}]
  %s3 = inlined_call_operand.hbm [shape: f32[3,128,128], index: 3, kind: input, shape index: {}]
  %s4 = inlined_call_operand.vmem [shape: f32[1,128], index: 4, kind: input, shape index: {}]
  %s5 = inlined_call_operand.hbm [shape: f32[2,16,128], index: 5, kind: output, shape index: {}]
  %s6 = sld [smem:[#allocation0]]
  $region61: #{tpu_custom_call.1} parent=0
    _
  %s8 = ssub.s32 1, %s6
  %s9 = scalar_select 0, %s8, %s6
  $region1: #{tpu_custom_call.1} parent=0
    #allocation2 [shape = 'u8[196608]{0}', space=vmem, size = 0x30000, scoped, tag = 'input window, operand 1, single buffered']
    #allocation3 [shape = 's32[2]{0}', space=sflag, size = 0x8, scoped, tag = 'scoped memory for tpu_custom_call.1']
    #allocation4 [shape = 's32[2]{0}', space=sflag, size = 0x8, scoped, tag = 'scoped memory for tpu_custom_call.1']
    #allocation5 [shape = 'u8[196608]{0}', space=vmem, size = 0x30000, scoped, tag = 'input window, operand 3, single buffered']
    #allocation6 [shape = 's32[1]{0}', space=sflag, size = 0x4, scoped, tag = 'scoped memory for tpu_custom_call.1']
    #allocation7 [shape = 'u8[16384]{0}', space=vmem, size = 0x4000, scoped, tag = 'output window, operand 0']
    %10 = vsyncpa [#allocation3], 0
    %11 = vsyncpa [#allocation6], 0
    %12 = vsyncpa [#allocation4], 0
    %s13 = scalar_lea.sflag [#allocation4], 1
    %14 = vsyncpa %s13, 0
    loop: start=0, step=1, limit=4
    $region2: #{tpu_custom_call.1} parent=1 // loop_pre_header
      _
    $region3: #{tpu_custom_call.1} parent=1 // loop_header
      %s16 = sphi 0, %s20
      %p17 = scmp.ge.s32.totalorder %s16, 4
      %s26 = sphi 0, %s28
      %s29 = sphi 0, %s26
      %s30 = sphi 0, %s29
      %s46 = sphi 0, %s30
      %s50 = sphi 0, %s50
      %s52 = sphi 0, %s50
      %s53 = sphi 0, %s52
      %s67 = sphi 0, %s53
      %s71 = sphi 0, %s71
      %s73 = sphi 0, %s71
      %s74 = sphi 0, %s73
      %s88 = sphi 0, %s74
      %s92 = sphi 0, %s92
      %s94 = sphi 0, %s92
      %s95 = sphi 0, %s94
      %s109 = sphi 0, %s95
      %s113 = sphi 0, %s113
      %s115 = sphi 0, %s113
      %s116 = sphi 0, %s115
      %s130 = sphi 0, %s116
      %s136 = sphi 0, %s138
      %s139 = sphi 0, %s136
      %s140 = sphi 0, %s139
      %s156 = sphi 0, %s140
    $region4: #{tpu_custom_call.1} parent=1 // loop_header_branch
      %19 = sbr.rel (%p17) target = $region8
    $region5: #{tpu_custom_call.1} parent=1 // loop_body
      %s21 = ssub.s32 %s16, 1
      %s22 = ssub.s32 %s16, 2
      %s23 = sadd.s32 %s16, 1
      %s24 = ssub.s32 %s16, %s23
      %p25 = scmp.eq.s32.totalorder %s24, 0
      %s27 = sadd.s32 %s26, 1
      %s28 = scalar_select %p25, %s26, %s27
      %p31 = pneg %p25
      %p32 = scmp.eq.s32.totalorder %s16, 1
      %p33 = por %p31, %p32
      %p34 = scmp.ne.s32.totalorder %s26, %s29
      %p35 = scmp.eq.s32.totalorder %s16, 0
      %p36 = por %p34, %p35
      %p37 = scmp.ne.s32.totalorder %s26, %s29
      %p38 = scmp.eq.s32.totalorder %s21, 1
      %p39 = por %p37, %p38
      %p40 = scmp.ne.s32.totalorder %s29, %s30
      %p41 = scmp.eq.s32.totalorder %s21, 0
      %p42 = por %p40, %p41
      %p43 = scmp.ne.s32.totalorder %s29, %s30
      %p44 = scmp.eq.s32.totalorder %s22, 1
      %p45 = por %p43, %p44
      %p47 = scmp.ne.s32.totalorder %s30, %s46
      %p48 = scmp.eq.s32.totalorder %s22, 0
      %p49 = por %p47, %p48
      %s51 = sadd.s32 %s50, 1
      %p54 = scmp.eq.s32.totalorder %s16, 1
      %p55 = scmp.ne.s32.totalorder %s50, %s52
      %p56 = scmp.eq.s32.totalorder %s16, 0
      %p57 = por %p55, %p56
      %p58 = scmp.ne.s32.totalorder %s50, %s52
      %p59 = scmp.eq.s32.totalorder %s21, 1
      %p60 = por %p58, %p59
      %p61 = scmp.ne.s32.totalorder %s52, %s53
      %p62 = scmp.eq.s32.totalorder %s21, 0
      %p63 = por %p61, %p62
      %p64 = scmp.ne.s32.totalorder %s52, %s53
      %p65 = scmp.eq.s32.totalorder %s22, 1
      %p66 = por %p64, %p65
      %p68 = scmp.ne.s32.totalorder %s53, %s67
      %p69 = scmp.eq.s32.totalorder %s22, 0
      %p70 = por %p68, %p69
      %s72 = sadd.s32 %s71, 1
      %p75 = scmp.eq.s32.totalorder %s16, 1
      %p76 = scmp.ne.s32.totalorder %s71, %s73
      %p77 = scmp.eq.s32.totalorder %s16, 0
      %p78 = por %p76, %p77
      %p79 = scmp.ne.s32.totalorder %s71, %s73
      %p80 = scmp.eq.s32.totalorder %s21, 1
      %p81 = por %p79, %p80
      %p82 = scmp.ne.s32.totalorder %s73, %s74
      %p83 = scmp.eq.s32.totalorder %s21, 0
      %p84 = por %p82, %p83
      %p85 = scmp.ne.s32.totalorder %s73, %s74
      %p86 = scmp.eq.s32.totalorder %s22, 1
      %p87 = por %p85, %p86
      %p89 = scmp.ne.s32.totalorder %s74, %s88
      %p90 = scmp.eq.s32.totalorder %s22, 0
      %p91 = por %p89, %p90
      %s93 = sadd.s32 %s92, 1
      %p96 = scmp.eq.s32.totalorder %s16, 1
      %p97 = scmp.ne.s32.totalorder %s92, %s94
      %p98 = scmp.eq.s32.totalorder %s16, 0
      %p99 = por %p97, %p98
      %p100 = scmp.ne.s32.totalorder %s92, %s94
      %p101 = scmp.eq.s32.totalorder %s21, 1
      %p102 = por %p100, %p101
      %p103 = scmp.ne.s32.totalorder %s94, %s95
      %p104 = scmp.eq.s32.totalorder %s21, 0
      %p105 = por %p103, %p104
      %p106 = scmp.ne.s32.totalorder %s94, %s95
      %p107 = scmp.eq.s32.totalorder %s22, 1
      %p108 = por %p106, %p107
      %p110 = scmp.ne.s32.totalorder %s95, %s109
      %p111 = scmp.eq.s32.totalorder %s22, 0
      %p112 = por %p110, %p111
      %s114 = sadd.s32 %s113, 1
      %p117 = scmp.eq.s32.totalorder %s16, 1
      %p118 = scmp.ne.s32.totalorder %s113, %s115
      %p119 = scmp.eq.s32.totalorder %s16, 0
      %p120 = por %p118, %p119
      %p121 = scmp.ne.s32.totalorder %s113, %s115
      %p122 = scmp.eq.s32.totalorder %s21, 1
      %p123 = por %p121, %p122
      %p124 = scmp.ne.s32.totalorder %s115, %s116
      %p125 = scmp.eq.s32.totalorder %s21, 0
      %p126 = por %p124, %p125
      %p127 = scmp.ne.s32.totalorder %s115, %s116
      %p128 = scmp.eq.s32.totalorder %s22, 1
      %p129 = por %p127, %p128
      %p131 = scmp.ne.s32.totalorder %s116, %s130
      %p132 = scmp.eq.s32.totalorder %s22, 0
      %p133 = por %p131, %p132
      %s134 = ssub.s32 %s16, %s23
      %p135 = scmp.eq.s32.totalorder %s134, 0
      %s137 = sadd.s32 %s136, 1
      %s138 = scalar_select %p135, %s136, %s137
      %p141 = pneg %p135
      %p142 = scmp.eq.s32.totalorder %s16, 1
      %p143 = por %p141, %p142
      %p144 = scmp.ne.s32.totalorder %s136, %s139
      %p145 = scmp.eq.s32.totalorder %s16, 0
      %p146 = por %p144, %p145
      %p147 = scmp.ne.s32.totalorder %s136, %s139
      %p148 = scmp.eq.s32.totalorder %s21, 1
      %p149 = por %p147, %p148
      %p150 = scmp.ne.s32.totalorder %s139, %s140
      %p151 = scmp.eq.s32.totalorder %s21, 0
      %p152 = por %p150, %p151
      %p153 = scmp.ne.s32.totalorder %s139, %s140
      %p154 = scmp.eq.s32.totalorder %s22, 1
      %p155 = por %p153, %p154
      %p157 = scmp.ne.s32.totalorder %s140, %s156
      %p158 = scmp.eq.s32.totalorder %s22, 0
      %p159 = por %p157, %p158
      %p160 = scmp.le.s32.totalorder 1, %s16
      %p161 = scmp.lt.s32.totalorder %s16, 3
      %p162 = pnand %p160, %p161
      %p163 = pneg %p162
      // Predicated region
      $region9: #{tpu_custom_call.1} parent=5 // pred_check
        _
      $region10: #{tpu_custom_call.1} parent=5 // pred_check_branch
        %165 = sbr.rel (%p162) target = $region12
      $region11: #{tpu_custom_call.1} parent=5 // pred_region
        %s166 = ssub.s32 %s16, 1
        // Predicated region
        $region13: #{tpu_custom_call.1} parent=11 // pred_check
          %p167 = pneg %p63
        $region14: #{tpu_custom_call.1} parent=11 // pred_check_branch
          %169 = sbr.rel (%p167) target = $region16
        $region15: #{tpu_custom_call.1} parent=11 // pred_region
          %s171 = ssub.s32 6144, 6144
          %172 = vsyncadd [#allocation3], %s171
          %s173 = sshll.u32 [#allocation2], 4
          %s174 = int_to_ptr.vmem [resolvable:$true] %s173
          %179 = dma.hbm_to_vmem [thread:$0]  %s1, 6144, %s174, [#allocation3], 128, 128, 8
        $region16: #{tpu_custom_call.1} parent=11 // pred_fallthru
          _
        // Predicated region
        $region17: #{tpu_custom_call.1} parent=11 // pred_check
          %p180 = pneg %p84
        $region18: #{tpu_custom_call.1} parent=11 // pred_check_branch
          %182 = sbr.rel (%p180) target = $region20
        $region19: #{tpu_custom_call.1} parent=11 // pred_region
          _
        $region20: #{tpu_custom_call.1} parent=11 // pred_fallthru
          _
        // Predicated region
        $region21: #{tpu_custom_call.1} parent=11 // pred_check
          %p183 = pneg %p105
        $region22: #{tpu_custom_call.1} parent=11 // pred_check_branch
          %185 = sbr.rel (%p183) target = $region24
        $region23: #{tpu_custom_call.1} parent=11 // pred_region
          %s187 = ssub.s32 6144, 6144
          %188 = vsyncadd [#allocation6], %s187
          %s189 = sshll.u32 [#allocation5], 4
          %s190 = int_to_ptr.vmem [resolvable:$true] %s189
          %195 = dma.hbm_to_vmem [thread:$0]  %s3, 6144, %s190, [#allocation6], 128, 128, 8
        $region24: #{tpu_custom_call.1} parent=11 // pred_fallthru
          _
        // Predicated region
        $region25: #{tpu_custom_call.1} parent=11 // pred_check
          %p196 = pneg %p126
        $region26: #{tpu_custom_call.1} parent=11 // pred_check_branch
          %198 = sbr.rel (%p196) target = $region28
        $region27: #{tpu_custom_call.1} parent=11 // pred_region
          _
        $region28: #{tpu_custom_call.1} parent=11 // pred_fallthru
          _
      $region12: #{tpu_custom_call.1} parent=5 // pred_fallthru
        _
      %p199 = scmp.lt.s32.totalorder %s16, 2
      // Predicated region
      $region29: #{tpu_custom_call.1} parent=5 // pred_check
        %p200 = pneg %p199
      $region30: #{tpu_custom_call.1} parent=5 // pred_check_branch
        %202 = sbr.rel (%p200) target = $region32
      $region31: #{tpu_custom_call.1} parent=5 // pred_region
        // Predicated region
        $region33: #{tpu_custom_call.1} parent=31 // pred_check
          %p203 = pneg %p36
        $region34: #{tpu_custom_call.1} parent=31 // pred_check_branch
          %205 = sbr.rel (%p203) target = $region36
        $region35: #{tpu_custom_call.1} parent=31 // pred_region
          %p206 = scmp.lt.s32.totalorder %s16, 1
          %s207 = scalar_select %p206, %s16, 1
          %s208 = smul.addr %s207, 3
          %s209 = smul.addr %s208, 8
          %s210 = scalar_lea.vmem %s0, %s209
        $region36: #{tpu_custom_call.1} parent=31 // pred_fallthru
          _
      $region32: #{tpu_custom_call.1} parent=5 // pred_fallthru
        _
      %p211 = scmp.le.s32.totalorder 1, %s16
      %p212 = scmp.lt.s32.totalorder %s16, 3
      %p213 = pnand %p211, %p212
      %p214 = pneg %p213
      // Predicated region
      $region37: #{tpu_custom_call.1} parent=5 // pred_check
        _
      $region38: #{tpu_custom_call.1} parent=5 // pred_check_branch
        %216 = sbr.rel (%p213) target = $region40
      $region39: #{tpu_custom_call.1} parent=5 // pred_region
        %s217 = ssub.s32 %s16, 1
        // Predicated region
        $region41: #{tpu_custom_call.1} parent=39 // pred_check
          %p218 = pneg %p63
        $region42: #{tpu_custom_call.1} parent=39 // pred_check_branch
          %220 = sbr.rel (%p218) target = $region44
        $region43: #{tpu_custom_call.1} parent=39 // pred_region
          %221 = dma.done [#allocation3], 6144
        $region44: #{tpu_custom_call.1} parent=39 // pred_fallthru
          _
        // Predicated region
        $region45: #{tpu_custom_call.1} parent=39 // pred_check
          %p222 = pneg %p105
        $region46: #{tpu_custom_call.1} parent=39 // pred_check_branch
          %224 = sbr.rel (%p222) target = $region48
        $region47: #{tpu_custom_call.1} parent=39 // pred_region
          %225 = dma.done [#allocation6], 6144
        $region48: #{tpu_custom_call.1} parent=39 // pred_fallthru
          _
        %p226 = scmp.lt.s32.totalorder %s21, 1
        %s227 = scalar_select %p226, %s21, 1
        %s228 = smul.addr %s227, 3
        %s229 = smul.addr %s228, 8
        %s230 = scalar_lea.vmem %s0, %s229
        %p231 = pneg %p42
        %p232 = pneg %p39
        %p233 = pneg %p63
        %p234 = pneg %p60
        %p235 = pneg %p84
        %p236 = pneg %p81
        %p237 = pneg %p105
        %p238 = pneg %p102
        %p239 = pneg %p126
        %p240 = pneg %p123
        %p241 = pneg %p152
        %p242 = pneg %p149
        %s243 = sand.u32 %s139, 1
        %s244 = scalar_lea.sflag [#allocation4], %s243
        %s245 = sand.u32 %s139, 1
        %s246 = smul.addr %s245, 16
        %s247 = scalar_lea.vmem [#allocation7], %s246
        %p248 = scmp.lt.s32.totalorder %s21, 1
        %s249 = scalar_select %p248, %s21, 1
        %s250 = smul.addr %s249, 3
        %s251 = smul.addr %s250, 8
        %s252 = scalar_lea.vmem %s0, %s251
        %v253 = vld [vmem:[%s252] sm:$0xff]
        %v254 = vld [vmem:[%s252 + $0x8] sm:$0xff]
        %v255 = vld [vmem:[%s252 + $0x10] sm:$0xf]
        %v256 = vld [vmem:[#allocation2] sm:$0xff]
        %v257 = vld [vmem:[#allocation2 + $0x8] sm:$0xff]
        %v258 = vld [vmem:[#allocation2 + $0x10] sm:$0xff]
        %v259 = vld [vmem:[#allocation2 + $0x18] sm:$0xff]
        %v260 = vld [vmem:[#allocation2 + $0x20] sm:$0xff]
        %v261 = vld [vmem:[#allocation2 + $0x28] sm:$0xff]
        %v262 = vld [vmem:[#allocation2 + $0x30] sm:$0xff]
        %v263 = vld [vmem:[#allocation2 + $0x38] sm:$0xff]
        %v264 = vld [vmem:[#allocation2 + $0x40] sm:$0xff]
        %v265 = vld [vmem:[#allocation2 + $0x48] sm:$0xff]
        %v266 = vld [vmem:[#allocation2 + $0x50] sm:$0xff]
        %v267 = vld [vmem:[#allocation2 + $0x58] sm:$0xff]
        %v268 = vld [vmem:[#allocation2 + $0x60] sm:$0xff]
        %v269 = vld [vmem:[#allocation2 + $0x68] sm:$0xff]
        %v270 = vld [vmem:[#allocation2 + $0x70] sm:$0xff]
        %v271 = vld [vmem:[#allocation2 + $0x78] sm:$0xff]
        %s272 = scalar_lea.vmem [#allocation2], 128
        %v273 = vld [vmem:[%s272] sm:$0xff]
        %v274 = vld [vmem:[%s272 + $0x8] sm:$0xff]
        %v275 = vld [vmem:[%s272 + $0x10] sm:$0xff]
        %v276 = vld [vmem:[%s272 + $0x18] sm:$0xff]
        %v277 = vld [vmem:[%s272 + $0x20] sm:$0xff]
        %v278 = vld [vmem:[%s272 + $0x28] sm:$0xff]
        %v279 = vld [vmem:[%s272 + $0x30] sm:$0xff]
        %v280 = vld [vmem:[%s272 + $0x38] sm:$0xff]
        %v281 = vld [vmem:[%s272 + $0x40] sm:$0xff]
        %v282 = vld [vmem:[%s272 + $0x48] sm:$0xff]
        %v283 = vld [vmem:[%s272 + $0x50] sm:$0xff]
        %v284 = vld [vmem:[%s272 + $0x58] sm:$0xff]
        %v285 = vld [vmem:[%s272 + $0x60] sm:$0xff]
        %v286 = vld [vmem:[%s272 + $0x68] sm:$0xff]
        %v287 = vld [vmem:[%s272 + $0x70] sm:$0xff]
        %v288 = vld [vmem:[%s272 + $0x78] sm:$0xff]
        %vm292 = vcmask 1046528
        %v293 = vrot.slane %v253, 1
        %v294 = vrot.slane %v254, 1
        %v295 = vsel %vm292, %v293, %v294
        %v296 = vrot.slane %v255, 1
        %v297 = vsel %vm292, %v294, %v296
        %301 = vmatprep.subr.mxu0 0.0
        %302 = vmatpush1.msra.mxu0 %v288
        %303 = vmatprep.subr.mxu0 0.0
        %304 = vmatpush1.msra.mxu0 %v287
        %305 = vmatprep.subr.mxu0 0.0
        %306 = vmatpush1.msra.mxu0 %v286
        %307 = vmatprep.subr.mxu0 0.0
        %308 = vmatpush1.msra.mxu0 %v285
        %309 = vmatprep.subr.mxu0 0.0
        %310 = vmatpush1.msra.mxu0 %v284
        %311 = vmatprep.subr.mxu0 0.0
        %312 = vmatpush1.msra.mxu0 %v283
        %313 = vmatprep.subr.mxu0 0.0
        %314 = vmatpush1.msra.mxu0 %v282
        %315 = vmatprep.subr.mxu0 0.0
        %316 = vmatpush1.msra.mxu0 %v281
        %317 = vmatprep.subr.mxu0 0.0
        %318 = vmatpush1.msra.mxu0 %v280
        %319 = vmatprep.subr.mxu0 0.0
        %320 = vmatpush1.msra.mxu0 %v279
        %321 = vmatprep.subr.mxu0 0.0
        %322 = vmatpush1.msra.mxu0 %v278
        %323 = vmatprep.subr.mxu0 0.0
        %324 = vmatpush1.msra.mxu0 %v277
        %325 = vmatprep.subr.mxu0 0.0
        %326 = vmatpush1.msra.mxu0 %v276
        %327 = vmatprep.subr.mxu0 0.0
        %328 = vmatpush1.msra.mxu0 %v275
        %329 = vmatprep.subr.mxu0 0.0
        %330 = vmatpush1.msra.mxu0 %v274
        %331 = vmatprep.subr.mxu0 0.0
        %332 = vmatpush1.msra.mxu0 %v273
        %333 = vmatprep.subr.mxu0 0.0
        %334 = vmatpush2.msra.mxu0 0.0
        %335 = vmatprep.subr.mxu0 0.0
        %336 = vmatpush2.msra.mxu0 0.0
        %337 = vmatprep.subr.mxu0 0.0
        %338 = vmatpush2.msra.mxu0 0.0
        %339 = vmatprep.subr.mxu0 0.0
        %340 = vmatpush2.msra.mxu0 0.0
        %341 = vmatprep.subr.mxu0 0.0
        %342 = vmatpush2.msra.mxu0 0.0
        %343 = vmatprep.subr.mxu0 0.0
        %344 = vmatpush2.msra.mxu0 0.0
        %345 = vmatprep.subr.mxu0 0.0
        %346 = vmatpush2.msra.mxu0 0.0
        %347 = vmatprep.subr.mxu0 0.0
        %348 = vmatpush2.msra.mxu0 0.0
        %349 = vmatprep.subr.mxu0 0.0
        %350 = vmatpush2.msra.mxu0 0.0
        %351 = vmatprep.subr.mxu0 0.0
        %352 = vmatpush2.msra.mxu0 0.0
        %353 = vmatprep.subr.mxu0 0.0
        %354 = vmatpush2.msra.mxu0 0.0
        %355 = vmatprep.subr.mxu0 0.0
        %356 = vmatpush2.msra.mxu0 0.0
        %357 = vmatprep.subr.mxu0 0.0
        %358 = vmatpush2.msra.mxu0 0.0
        %359 = vmatprep.subr.mxu0 0.0
        %360 = vmatpush2.msra.mxu0 0.0
        %361 = vmatprep.subr.mxu0 0.0
        %362 = vmatpush2.msra.mxu0 0.0
        %363 = vmatprep.subr.mxu0 0.0
        %364 = vmatpush2.msra.mxu0 0.0
        %365 = vmatprep.mubr.f32.mxu0 0.0
        %366 = vmatmul.mubr.f32.gmra.mxu0 %v295
        %v367 = vpop.f32.mrf.mxu0
        %v368 = vadd.f32 0.0, %v367
        %v369 = vpop.f32.mrf.mxu0
        %370 = vmatprep.mubr.f32.mxu0 0.0
        %371 = vmatmul.mubr.f32.gmra.mxu0 %v297
        %v372 = vpop.f32.mrf.mxu0
        %v373 = vadd.f32 0.0, %v372
        %v374 = vpop.f32.mrf.mxu0
        %375 = vmatprep.mubr.f32.mxu0 0.0
        %376 = vmatmul.mubr.f32.gmra.mxu0 %v296
        %v377 = vpop.f32.mrf.mxu0
        %v378 = vadd.f32 0.0, %v377
        %v379 = vpop.f32.mrf.mxu0
        %380 = vdwg.mxu0
        %381 = vmatprep.subr.mxu0 0.0
        %382 = vmatpush1.msra.mxu0 %v271
        %383 = vmatprep.subr.mxu0 0.0
        %384 = vmatpush1.msra.mxu0 %v270
        %385 = vmatprep.subr.mxu0 0.0
        %386 = vmatpush1.msra.mxu0 %v269
        %387 = vmatprep.subr.mxu0 0.0
        %388 = vmatpush1.msra.mxu0 %v268
        %389 = vmatprep.subr.mxu0 0.0
        %390 = vmatpush1.msra.mxu0 %v267
        %391 = vmatprep.subr.mxu0 0.0
        %392 = vmatpush1.msra.mxu0 %v266
        %393 = vmatprep.subr.mxu0 0.0
        %394 = vmatpush1.msra.mxu0 %v265
        %395 = vmatprep.subr.mxu0 0.0
        %396 = vmatpush1.msra.mxu0 %v264
        %397 = vmatprep.subr.mxu0 0.0
        %398 = vmatpush1.msra.mxu0 %v263
        %399 = vmatprep.subr.mxu0 0.0
        %400 = vmatpush1.msra.mxu0 %v262
        %401 = vmatprep.subr.mxu0 0.0
        %402 = vmatpush1.msra.mxu0 %v261
        %403 = vmatprep.subr.mxu0 0.0
        %404 = vmatpush1.msra.mxu0 %v260
        %405 = vmatprep.subr.mxu0 0.0
        %406 = vmatpush1.msra.mxu0 %v259
        %407 = vmatprep.subr.mxu0 0.0
        %408 = vmatpush1.msra.mxu0 %v258
        %409 = vmatprep.subr.mxu0 0.0
        %410 = vmatpush1.msra.mxu0 %v257
        %411 = vmatprep.subr.mxu0 0.0
        %412 = vmatpush1.msra.mxu0 %v256
        %413 = vmatprep.subr.mxu0 0.0
        %414 = vmatpush2.msra.mxu0 0.0
        %415 = vmatprep.subr.mxu0 0.0
        %416 = vmatpush2.msra.mxu0 0.0
        %417 = vmatprep.subr.mxu0 0.0
        %418 = vmatpush2.msra.mxu0 0.0
        %419 = vmatprep.subr.mxu0 0.0
        %420 = vmatpush2.msra.mxu0 0.0
        %421 = vmatprep.subr.mxu0 0.0
        %422 = vmatpush2.msra.mxu0 0.0
        %423 = vmatprep.subr.mxu0 0.0
        %424 = vmatpush2.msra.mxu0 0.0
        %425 = vmatprep.subr.mxu0 0.0
        %426 = vmatpush2.msra.mxu0 0.0
        %427 = vmatprep.subr.mxu0 0.0
        %428 = vmatpush2.msra.mxu0 0.0
        %429 = vmatprep.subr.mxu0 0.0
        %430 = vmatpush2.msra.mxu0 0.0
        %431 = vmatprep.subr.mxu0 0.0
        %432 = vmatpush2.msra.mxu0 0.0
        %433 = vmatprep.subr.mxu0 0.0
        %434 = vmatpush2.msra.mxu0 0.0
        %435 = vmatprep.subr.mxu0 0.0
        %436 = vmatpush2.msra.mxu0 0.0
        %437 = vmatprep.subr.mxu0 0.0
        %438 = vmatpush2.msra.mxu0 0.0
        %439 = vmatprep.subr.mxu0 0.0
        %440 = vmatpush2.msra.mxu0 0.0
        %441 = vmatprep.subr.mxu0 0.0
        %442 = vmatpush2.msra.mxu0 0.0
        %443 = vmatprep.subr.mxu0 0.0
        %444 = vmatpush2.msra.mxu0 0.0
        %445 = vmatprep.mubr.f32.mxu0 0.0
        %446 = vmatmul.mubr.f32.gmra.mxu0 %v253
        %v447 = vpop.f32.mrf.mxu0
        %v448 = vadd.f32 %v368, %v447
        %v449 = vpop.f32.mrf.mxu0
        %450 = vmatprep.mubr.f32.mxu0 0.0
        %451 = vmatmul.mubr.f32.gmra.mxu0 %v254
        %v452 = vpop.f32.mrf.mxu0
        %v453 = vadd.f32 %v373, %v452
        %v454 = vpop.f32.mrf.mxu0
        %455 = vmatprep.mubr.f32.mxu0 0.0
        %456 = vmatmul.mubr.f32.gmra.mxu0 %v255
        %v457 = vpop.f32.mrf.mxu0
        %v458 = vadd.f32 %v378, %v457
        %v459 = vpop.f32.mrf.mxu0
        %460 = vdwg.mxu0
        %s461 = scalar_lea.vmem [#allocation2], 256
        %v462 = vld [vmem:[%s461] sm:$0xff]
        %v463 = vld [vmem:[%s461 + $0x8] sm:$0xff]
        %v464 = vld [vmem:[%s461 + $0x10] sm:$0xff]
        %v465 = vld [vmem:[%s461 + $0x18] sm:$0xff]
        %v466 = vld [vmem:[%s461 + $0x20] sm:$0xff]
        %v467 = vld [vmem:[%s461 + $0x28] sm:$0xff]
        %v468 = vld [vmem:[%s461 + $0x30] sm:$0xff]
        %v469 = vld [vmem:[%s461 + $0x38] sm:$0xff]
        %v470 = vld [vmem:[%s461 + $0x40] sm:$0xff]
        %v471 = vld [vmem:[%s461 + $0x48] sm:$0xff]
        %v472 = vld [vmem:[%s461 + $0x50] sm:$0xff]
        %v473 = vld [vmem:[%s461 + $0x58] sm:$0xff]
        %v474 = vld [vmem:[%s461 + $0x60] sm:$0xff]
        %v475 = vld [vmem:[%s461 + $0x68] sm:$0xff]
        %v476 = vld [vmem:[%s461 + $0x70] sm:$0xff]
        %v477 = vld [vmem:[%s461 + $0x78] sm:$0xff]
        %vm478 = vcmask 1045504
        %v479 = vrot.slane %v253, 2
        %v480 = vrot.slane %v254, 2
        %v481 = vsel %vm478, %v479, %v480
        %v482 = vrot.slane %v255, 2
        %v483 = vsel %vm478, %v480, %v482
        %487 = vmatprep.subr.mxu0 0.0
        %488 = vmatpush1.msra.mxu0 %v477
        %489 = vmatprep.subr.mxu0 0.0
        %490 = vmatpush1.msra.mxu0 %v476
        %491 = vmatprep.subr.mxu0 0.0
        %492 = vmatpush1.msra.mxu0 %v475
        %493 = vmatprep.subr.mxu0 0.0
        %494 = vmatpush1.msra.mxu0 %v474
        %495 = vmatprep.subr.mxu0 0.0
        %496 = vmatpush1.msra.mxu0 %v473
        %497 = vmatprep.subr.mxu0 0.0
        %498 = vmatpush1.msra.mxu0 %v472
        %499 = vmatprep.subr.mxu0 0.0
        %500 = vmatpush1.msra.mxu0 %v471
        %501 = vmatprep.subr.mxu0 0.0
        %502 = vmatpush1.msra.mxu0 %v470
        %503 = vmatprep.subr.mxu0 0.0
        %504 = vmatpush1.msra.mxu0 %v469
        %505 = vmatprep.subr.mxu0 0.0
        %506 = vmatpush1.msra.mxu0 %v468
        %507 = vmatprep.subr.mxu0 0.0
        %508 = vmatpush1.msra.mxu0 %v467
        %509 = vmatprep.subr.mxu0 0.0
        %510 = vmatpush1.msra.mxu0 %v466
        %511 = vmatprep.subr.mxu0 0.0
        %512 = vmatpush1.msra.mxu0 %v465
        %513 = vmatprep.subr.mxu0 0.0
        %514 = vmatpush1.msra.mxu0 %v464
        %515 = vmatprep.subr.mxu0 0.0
        %516 = vmatpush1.msra.mxu0 %v463
        %517 = vmatprep.subr.mxu0 0.0
        %518 = vmatpush1.msra.mxu0 %v462
        %519 = vmatprep.subr.mxu0 0.0
        %520 = vmatpush2.msra.mxu0 0.0
        %521 = vmatprep.subr.mxu0 0.0
        %522 = vmatpush2.msra.mxu0 0.0
        %523 = vmatprep.subr.mxu0 0.0
        %524 = vmatpush2.msra.mxu0 0.0
        %525 = vmatprep.subr.mxu0 0.0
        %526 = vmatpush2.msra.mxu0 0.0
        %527 = vmatprep.subr.mxu0 0.0
        %528 = vmatpush2.msra.mxu0 0.0
        %529 = vmatprep.subr.mxu0 0.0
        %530 = vmatpush2.msra.mxu0 0.0
        %531 = vmatprep.subr.mxu0 0.0
        %532 = vmatpush2.msra.mxu0 0.0
        %533 = vmatprep.subr.mxu0 0.0
        %534 = vmatpush2.msra.mxu0 0.0
        %535 = vmatprep.subr.mxu0 0.0
        %536 = vmatpush2.msra.mxu0 0.0
        %537 = vmatprep.subr.mxu0 0.0
        %538 = vmatpush2.msra.mxu0 0.0
        %539 = vmatprep.subr.mxu0 0.0
        %540 = vmatpush2.msra.mxu0 0.0
        %541 = vmatprep.subr.mxu0 0.0
        %542 = vmatpush2.msra.mxu0 0.0
        %543 = vmatprep.subr.mxu0 0.0
        %544 = vmatpush2.msra.mxu0 0.0
        %545 = vmatprep.subr.mxu0 0.0
        %546 = vmatpush2.msra.mxu0 0.0
        %547 = vmatprep.subr.mxu0 0.0
        %548 = vmatpush2.msra.mxu0 0.0
        %549 = vmatprep.subr.mxu0 0.0
        %550 = vmatpush2.msra.mxu0 0.0
        %551 = vmatprep.mubr.f32.mxu0 0.0
        %552 = vmatmul.mubr.f32.gmra.mxu0 %v481
        %v553 = vpop.f32.mrf.mxu0
        %v554 = vadd.f32 0.0, %v553
        %v555 = vpop.f32.mrf.mxu0
        %556 = vmatprep.mubr.f32.mxu0 0.0
        %557 = vmatmul.mubr.f32.gmra.mxu0 %v483
        %v558 = vpop.f32.mrf.mxu0
        %v559 = vadd.f32 0.0, %v558
        %v560 = vpop.f32.mrf.mxu0
        %561 = vmatprep.mubr.f32.mxu0 0.0
        %562 = vmatmul.mubr.f32.gmra.mxu0 %v482
        %v563 = vpop.f32.mrf.mxu0
        %v564 = vadd.f32 0.0, %v563
        %v565 = vpop.f32.mrf.mxu0
        %566 = vdwg.mxu0
        %v567 = vadd.f32 %v448, %v554
        %v568 = vadd.f32 %v453, %v559
        %v569 = vadd.f32 %v458, %v564
        %v570 = vld [vmem:[%s2] sm:$0x1]
        %v572 = vlaneseq
        %v573 = vshrl.u32 %v572, 7
        %v574 = vsub.s32 0, %v573
        %v575 = vrot.slane %v570, %v574
        %v577 = vadd.f32 %v567, %v575
        %v578 = vadd.f32 %v568, %v575
        %v579 = vadd.f32 %v569, %v575
        %v580 = vtanh.pop %v577
        %v581 = vtanh.pop %v578
        %v582 = vtanh.pop %v579
        %v583 = vlaneseq
        %v584 = vshrl.u32 %v583, 7
        %v585 = vadd.s32 %v584, 8
        %v586 = vadd.s32 %v584, 16
        %vm587 = vcmp.ge.s32.totalorder %v584, 1
        %vm588 = vcmp.ge.s32.totalorder %v585, 1
        %vm589 = vcmp.ge.s32.totalorder %v586, 1
        %vm590 = vcmp.le.s32.totalorder %v584, 16
        %vm591 = vcmp.le.s32.totalorder %v585, 16
        %vm592 = vcmp.le.s32.totalorder %v586, 16
        %vm593 = vmand %vm587, %vm590
        %vm594 = vmand %vm588, %vm591
        %vm595 = vmand %vm589, %vm592
        %v596 = vsel %vm593, 1, 0
        %v597 = vsel %vm594, 1, 0
        %v598 = vsel %vm595, 1, 0
        %vm599 = vcmp.eq.s32.totalorder %v596, 1
        %vm600 = vcmp.eq.s32.totalorder %v597, 1
        %vm601 = vcmp.eq.s32.totalorder %v598, 1
        %v602 = vsel %vm599, %v580, 0.0
        %v603 = vsel %vm600, %v581, 0.0
        %v604 = vsel %vm601, %v582, 0.0
        %v605 = vld [vmem:[#allocation5] sm:$0xff]
        %v606 = vld [vmem:[#allocation5 + $0x8] sm:$0xff]
        %v607 = vld [vmem:[#allocation5 + $0x10] sm:$0xff]
        %v608 = vld [vmem:[#allocation5 + $0x18] sm:$0xff]
        %v609 = vld [vmem:[#allocation5 + $0x20] sm:$0xff]
        %v610 = vld [vmem:[#allocation5 + $0x28] sm:$0xff]
        %v611 = vld [vmem:[#allocation5 + $0x30] sm:$0xff]
        %v612 = vld [vmem:[#allocation5 + $0x38] sm:$0xff]
        %v613 = vld [vmem:[#allocation5 + $0x40] sm:$0xff]
        %v614 = vld [vmem:[#allocation5 + $0x48] sm:$0xff]
        %v615 = vld [vmem:[#allocation5 + $0x50] sm:$0xff]
        %v616 = vld [vmem:[#allocation5 + $0x58] sm:$0xff]
        %v617 = vld [vmem:[#allocation5 + $0x60] sm:$0xff]
        %v618 = vld [vmem:[#allocation5 + $0x68] sm:$0xff]
        %v619 = vld [vmem:[#allocation5 + $0x70] sm:$0xff]
        %v620 = vld [vmem:[#allocation5 + $0x78] sm:$0xff]
        %s621 = scalar_lea.vmem [#allocation5], 128
        %v622 = vld [vmem:[%s621] sm:$0xff]
        %v623 = vld [vmem:[%s621 + $0x8] sm:$0xff]
        %v624 = vld [vmem:[%s621 + $0x10] sm:$0xff]
        %v625 = vld [vmem:[%s621 + $0x18] sm:$0xff]
        %v626 = vld [vmem:[%s621 + $0x20] sm:$0xff]
        %v627 = vld [vmem:[%s621 + $0x28] sm:$0xff]
        %v628 = vld [vmem:[%s621 + $0x30] sm:$0xff]
        %v629 = vld [vmem:[%s621 + $0x38] sm:$0xff]
        %v630 = vld [vmem:[%s621 + $0x40] sm:$0xff]
        %v631 = vld [vmem:[%s621 + $0x48] sm:$0xff]
        %v632 = vld [vmem:[%s621 + $0x50] sm:$0xff]
        %v633 = vld [vmem:[%s621 + $0x58] sm:$0xff]
        %v634 = vld [vmem:[%s621 + $0x60] sm:$0xff]
        %v635 = vld [vmem:[%s621 + $0x68] sm:$0xff]
        %v636 = vld [vmem:[%s621 + $0x70] sm:$0xff]
        %v637 = vld [vmem:[%s621 + $0x78] sm:$0xff]
        %v641 = vrot.slane %v602, 1
        %v642 = vrot.slane %v603, 1
        %v643 = vsel %vm292, %v641, %v642
        %v644 = vrot.slane %v604, 1
        %v645 = vsel %vm292, %v642, %v644
        %648 = vmatprep.subr.mxu0 0.0
        %649 = vmatpush1.msra.mxu0 %v637
        %650 = vmatprep.subr.mxu0 0.0
        %651 = vmatpush1.msra.mxu0 %v636
        %652 = vmatprep.subr.mxu0 0.0
        %653 = vmatpush1.msra.mxu0 %v635
        %654 = vmatprep.subr.mxu0 0.0
        %655 = vmatpush1.msra.mxu0 %v634
        %656 = vmatprep.subr.mxu0 0.0
        %657 = vmatpush1.msra.mxu0 %v633
        %658 = vmatprep.subr.mxu0 0.0
        %659 = vmatpush1.msra.mxu0 %v632
        %660 = vmatprep.subr.mxu0 0.0
        %661 = vmatpush1.msra.mxu0 %v631
        %662 = vmatprep.subr.mxu0 0.0
        %663 = vmatpush1.msra.mxu0 %v630
        %664 = vmatprep.subr.mxu0 0.0
        %665 = vmatpush1.msra.mxu0 %v629
        %666 = vmatprep.subr.mxu0 0.0
        %667 = vmatpush1.msra.mxu0 %v628
        %668 = vmatprep.subr.mxu0 0.0
        %669 = vmatpush1.msra.mxu0 %v627
        %670 = vmatprep.subr.mxu0 0.0
        %671 = vmatpush1.msra.mxu0 %v626
        %672 = vmatprep.subr.mxu0 0.0
        %673 = vmatpush1.msra.mxu0 %v625
        %674 = vmatprep.subr.mxu0 0.0
        %675 = vmatpush1.msra.mxu0 %v624
        %676 = vmatprep.subr.mxu0 0.0
        %677 = vmatpush1.msra.mxu0 %v623
        %678 = vmatprep.subr.mxu0 0.0
        %679 = vmatpush1.msra.mxu0 %v622
        %680 = vmatprep.subr.mxu0 0.0
        %681 = vmatpush2.msra.mxu0 0.0
        %682 = vmatprep.subr.mxu0 0.0
        %683 = vmatpush2.msra.mxu0 0.0
        %684 = vmatprep.subr.mxu0 0.0
        %685 = vmatpush2.msra.mxu0 0.0
        %686 = vmatprep.subr.mxu0 0.0
        %687 = vmatpush2.msra.mxu0 0.0
        %688 = vmatprep.subr.mxu0 0.0
        %689 = vmatpush2.msra.mxu0 0.0
        %690 = vmatprep.subr.mxu0 0.0
        %691 = vmatpush2.msra.mxu0 0.0
        %692 = vmatprep.subr.mxu0 0.0
        %693 = vmatpush2.msra.mxu0 0.0
        %694 = vmatprep.subr.mxu0 0.0
        %695 = vmatpush2.msra.mxu0 0.0
        %696 = vmatprep.subr.mxu0 0.0
        %697 = vmatpush2.msra.mxu0 0.0
        %698 = vmatprep.subr.mxu0 0.0
        %699 = vmatpush2.msra.mxu0 0.0
        %700 = vmatprep.subr.mxu0 0.0
        %701 = vmatpush2.msra.mxu0 0.0
        %702 = vmatprep.subr.mxu0 0.0
        %703 = vmatpush2.msra.mxu0 0.0
        %704 = vmatprep.subr.mxu0 0.0
        %705 = vmatpush2.msra.mxu0 0.0
        %706 = vmatprep.subr.mxu0 0.0
        %707 = vmatpush2.msra.mxu0 0.0
        %708 = vmatprep.subr.mxu0 0.0
        %709 = vmatpush2.msra.mxu0 0.0
        %710 = vmatprep.subr.mxu0 0.0
        %711 = vmatpush2.msra.mxu0 0.0
        %712 = vmatprep.mubr.f32.mxu0 0.0
        %713 = vmatmul.mubr.f32.gmra.mxu0 %v643
        %v714 = vpop.f32.mrf.mxu0
        %v715 = vadd.f32 0.0, %v714
        %v716 = vpop.f32.mrf.mxu0
        %717 = vmatprep.mubr.f32.mxu0 0.0
        %718 = vmatmul.mubr.f32.gmra.mxu0 %v645
        %v719 = vpop.f32.mrf.mxu0
        %v720 = vadd.f32 0.0, %v719
        %v721 = vpop.f32.mrf.mxu0
        %722 = vdwg.mxu0
        %723 = vmatprep.subr.mxu0 0.0
        %724 = vmatpush1.msra.mxu0 %v620
        %725 = vmatprep.subr.mxu0 0.0
        %726 = vmatpush1.msra.mxu0 %v619
        %727 = vmatprep.subr.mxu0 0.0
        %728 = vmatpush1.msra.mxu0 %v618
        %729 = vmatprep.subr.mxu0 0.0
        %730 = vmatpush1.msra.mxu0 %v617
        %731 = vmatprep.subr.mxu0 0.0
        %732 = vmatpush1.msra.mxu0 %v616
        %733 = vmatprep.subr.mxu0 0.0
        %734 = vmatpush1.msra.mxu0 %v615
        %735 = vmatprep.subr.mxu0 0.0
        %736 = vmatpush1.msra.mxu0 %v614
        %737 = vmatprep.subr.mxu0 0.0
        %738 = vmatpush1.msra.mxu0 %v613
        %739 = vmatprep.subr.mxu0 0.0
        %740 = vmatpush1.msra.mxu0 %v612
        %741 = vmatprep.subr.mxu0 0.0
        %742 = vmatpush1.msra.mxu0 %v611
        %743 = vmatprep.subr.mxu0 0.0
        %744 = vmatpush1.msra.mxu0 %v610
        %745 = vmatprep.subr.mxu0 0.0
        %746 = vmatpush1.msra.mxu0 %v609
        %747 = vmatprep.subr.mxu0 0.0
        %748 = vmatpush1.msra.mxu0 %v608
        %749 = vmatprep.subr.mxu0 0.0
        %750 = vmatpush1.msra.mxu0 %v607
        %751 = vmatprep.subr.mxu0 0.0
        %752 = vmatpush1.msra.mxu0 %v606
        %753 = vmatprep.subr.mxu0 0.0
        %754 = vmatpush1.msra.mxu0 %v605
        %755 = vmatprep.subr.mxu0 0.0
        %756 = vmatpush2.msra.mxu0 0.0
        %757 = vmatprep.subr.mxu0 0.0
        %758 = vmatpush2.msra.mxu0 0.0
        %759 = vmatprep.subr.mxu0 0.0
        %760 = vmatpush2.msra.mxu0 0.0
        %761 = vmatprep.subr.mxu0 0.0
        %762 = vmatpush2.msra.mxu0 0.0
        %763 = vmatprep.subr.mxu0 0.0
        %764 = vmatpush2.msra.mxu0 0.0
        %765 = vmatprep.subr.mxu0 0.0
        %766 = vmatpush2.msra.mxu0 0.0
        %767 = vmatprep.subr.mxu0 0.0
        %768 = vmatpush2.msra.mxu0 0.0
        %769 = vmatprep.subr.mxu0 0.0
        %770 = vmatpush2.msra.mxu0 0.0
        %771 = vmatprep.subr.mxu0 0.0
        %772 = vmatpush2.msra.mxu0 0.0
        %773 = vmatprep.subr.mxu0 0.0
        %774 = vmatpush2.msra.mxu0 0.0
        %775 = vmatprep.subr.mxu0 0.0
        %776 = vmatpush2.msra.mxu0 0.0
        %777 = vmatprep.subr.mxu0 0.0
        %778 = vmatpush2.msra.mxu0 0.0
        %779 = vmatprep.subr.mxu0 0.0
        %780 = vmatpush2.msra.mxu0 0.0
        %781 = vmatprep.subr.mxu0 0.0
        %782 = vmatpush2.msra.mxu0 0.0
        %783 = vmatprep.subr.mxu0 0.0
        %784 = vmatpush2.msra.mxu0 0.0
        %785 = vmatprep.subr.mxu0 0.0
        %786 = vmatpush2.msra.mxu0 0.0
        %787 = vmatprep.mubr.f32.mxu0 0.0
        %788 = vmatmul.mubr.f32.gmra.mxu0 %v602
        %v789 = vpop.f32.mrf.mxu0
        %v790 = vadd.f32 %v715, %v789
        %v791 = vpop.f32.mrf.mxu0
        %792 = vmatprep.mubr.f32.mxu0 0.0
        %793 = vmatmul.mubr.f32.gmra.mxu0 %v603
        %v794 = vpop.f32.mrf.mxu0
        %v795 = vadd.f32 %v720, %v794
        %v796 = vpop.f32.mrf.mxu0
        %797 = vdwg.mxu0
        %s798 = scalar_lea.vmem [#allocation5], 256
        %v799 = vld [vmem:[%s798] sm:$0xff]
        %v800 = vld [vmem:[%s798 + $0x8] sm:$0xff]
        %v801 = vld [vmem:[%s798 + $0x10] sm:$0xff]
        %v802 = vld [vmem:[%s798 + $0x18] sm:$0xff]
        %v803 = vld [vmem:[%s798 + $0x20] sm:$0xff]
        %v804 = vld [vmem:[%s798 + $0x28] sm:$0xff]
        %v805 = vld [vmem:[%s798 + $0x30] sm:$0xff]
        %v806 = vld [vmem:[%s798 + $0x38] sm:$0xff]
        %v807 = vld [vmem:[%s798 + $0x40] sm:$0xff]
        %v808 = vld [vmem:[%s798 + $0x48] sm:$0xff]
        %v809 = vld [vmem:[%s798 + $0x50] sm:$0xff]
        %v810 = vld [vmem:[%s798 + $0x58] sm:$0xff]
        %v811 = vld [vmem:[%s798 + $0x60] sm:$0xff]
        %v812 = vld [vmem:[%s798 + $0x68] sm:$0xff]
        %v813 = vld [vmem:[%s798 + $0x70] sm:$0xff]
        %v814 = vld [vmem:[%s798 + $0x78] sm:$0xff]
        %v815 = vrot.slane %v602, 2
        %v816 = vrot.slane %v603, 2
        %v817 = vsel %vm478, %v815, %v816
        %v818 = vrot.slane %v604, 2
        %v819 = vsel %vm478, %v816, %v818
        %822 = vmatprep.subr.mxu0 0.0
        %823 = vmatpush1.msra.mxu0 %v814
        %824 = vmatprep.subr.mxu0 0.0
        %825 = vmatpush1.msra.mxu0 %v813
        %826 = vmatprep.subr.mxu0 0.0
        %827 = vmatpush1.msra.mxu0 %v812
        %828 = vmatprep.subr.mxu0 0.0
        %829 = vmatpush1.msra.mxu0 %v811
        %830 = vmatprep.subr.mxu0 0.0
        %831 = vmatpush1.msra.mxu0 %v810
        %832 = vmatprep.subr.mxu0 0.0
        %833 = vmatpush1.msra.mxu0 %v809
        %834 = vmatprep.subr.mxu0 0.0
        %835 = vmatpush1.msra.mxu0 %v808
        %836 = vmatprep.subr.mxu0 0.0
        %837 = vmatpush1.msra.mxu0 %v807
        %838 = vmatprep.subr.mxu0 0.0
        %839 = vmatpush1.msra.mxu0 %v806
        %840 = vmatprep.subr.mxu0 0.0
        %841 = vmatpush1.msra.mxu0 %v805
        %842 = vmatprep.subr.mxu0 0.0
        %843 = vmatpush1.msra.mxu0 %v804
        %844 = vmatprep.subr.mxu0 0.0
        %845 = vmatpush1.msra.mxu0 %v803
        %846 = vmatprep.subr.mxu0 0.0
        %847 = vmatpush1.msra.mxu0 %v802
        %848 = vmatprep.subr.mxu0 0.0
        %849 = vmatpush1.msra.mxu0 %v801
        %850 = vmatprep.subr.mxu0 0.0
        %851 = vmatpush1.msra.mxu0 %v800
        %852 = vmatprep.subr.mxu0 0.0
        %853 = vmatpush1.msra.mxu0 %v799
        %854 = vmatprep.subr.mxu0 0.0
        %855 = vmatpush2.msra.mxu0 0.0
        %856 = vmatprep.subr.mxu0 0.0
        %857 = vmatpush2.msra.mxu0 0.0
        %858 = vmatprep.subr.mxu0 0.0
        %859 = vmatpush2.msra.mxu0 0.0
        %860 = vmatprep.subr.mxu0 0.0
        %861 = vmatpush2.msra.mxu0 0.0
        %862 = vmatprep.subr.mxu0 0.0
        %863 = vmatpush2.msra.mxu0 0.0
        %864 = vmatprep.subr.mxu0 0.0
        %865 = vmatpush2.msra.mxu0 0.0
        %866 = vmatprep.subr.mxu0 0.0
        %867 = vmatpush2.msra.mxu0 0.0
        %868 = vmatprep.subr.mxu0 0.0
        %869 = vmatpush2.msra.mxu0 0.0
        %870 = vmatprep.subr.mxu0 0.0
        %871 = vmatpush2.msra.mxu0 0.0
        %872 = vmatprep.subr.mxu0 0.0
        %873 = vmatpush2.msra.mxu0 0.0
        %874 = vmatprep.subr.mxu0 0.0
        %875 = vmatpush2.msra.mxu0 0.0
        %876 = vmatprep.subr.mxu0 0.0
        %877 = vmatpush2.msra.mxu0 0.0
        %878 = vmatprep.subr.mxu0 0.0
        %879 = vmatpush2.msra.mxu0 0.0
        %880 = vmatprep.subr.mxu0 0.0
        %881 = vmatpush2.msra.mxu0 0.0
        %882 = vmatprep.subr.mxu0 0.0
        %883 = vmatpush2.msra.mxu0 0.0
        %884 = vmatprep.subr.mxu0 0.0
        %885 = vmatpush2.msra.mxu0 0.0
        %886 = vmatprep.mubr.f32.mxu0 0.0
        %887 = vmatmul.mubr.f32.gmra.mxu0 %v817
        %v888 = vpop.f32.mrf.mxu0
        %v889 = vadd.f32 0.0, %v888
        %v890 = vpop.f32.mrf.mxu0
        %891 = vmatprep.mubr.f32.mxu0 0.0
        %892 = vmatmul.mubr.f32.gmra.mxu0 %v819
        %v893 = vpop.f32.mrf.mxu0
        %v894 = vadd.f32 0.0, %v893
        %v895 = vpop.f32.mrf.mxu0
        %896 = vdwg.mxu0
        %v897 = vadd.f32 %v790, %v889
        %v898 = vadd.f32 %v795, %v894
        %v899 = vld [vmem:[%s4] sm:$0x1]
        %v901 = vlaneseq
        %v902 = vshrl.u32 %v901, 7
        %v903 = vsub.s32 0, %v902
        %v904 = vrot.slane %v899, %v903
        %v906 = vadd.f32 %v897, %v904
        %v907 = vadd.f32 %v898, %v904
        %v908 = vadd.f32 %v906, %v481
        %v909 = vadd.f32 %v907, %v483
        %v910 = vtanh.pop %v908
        %v911 = vtanh.pop %v909
        %912 = vst [vmem:[%s247] sm:$0xff] %v910
        %913 = vst [vmem:[%s247 + $0x8] sm:$0xff] %v911
        %s914 = sand.u32 %s139, 1
        %s915 = scalar_lea.sflag [#allocation4], %s914
        %s916 = sand.u32 %s139, 1
        %s917 = smul.addr %s916, 16
        %s918 = scalar_lea.vmem [#allocation7], %s917
        // Predicated region
        $region49: #{tpu_custom_call.1} parent=39 // pred_check
          %p919 = pneg %p149
        $region50: #{tpu_custom_call.1} parent=39 // pred_check_branch
          %921 = sbr.rel (%p919) target = $region52
        $region51: #{tpu_custom_call.1} parent=39 // pred_region
          %s923 = ssub.s32 256, 256
          %924 = vsyncadd %s915, %s923
          %s925 = smul.addr %s21, 2
          %s926 = smul.addr %s925, 128
          %s927 = scalar_lea.hbm %s5, %s926
          %s928 = sshll.u32 %s918, 4
          %s929 = int_to_ptr.vmem [resolvable:$true] %s928
          %934 = dma.vmem_to_hbm [thread:$0]  %s929, 256, %s927, %s915, 128, 128, 8
        $region52: #{tpu_custom_call.1} parent=39 // pred_fallthru
          _
      $region40: #{tpu_custom_call.1} parent=5 // pred_fallthru
        _
      %p935 = scmp.le.s32.totalorder 2, %s16
      // Predicated region
      $region53: #{tpu_custom_call.1} parent=5 // pred_check
        %p936 = pneg %p935
      $region54: #{tpu_custom_call.1} parent=5 // pred_check_branch
        %938 = sbr.rel (%p936) target = $region56
      $region55: #{tpu_custom_call.1} parent=5 // pred_region
        %s939 = ssub.s32 %s16, 2
        // Predicated region
        $region57: #{tpu_custom_call.1} parent=55 // pred_check
          %p940 = pneg %p155
        $region58: #{tpu_custom_call.1} parent=55 // pred_check_branch
          %942 = sbr.rel (%p940) target = $region60
        $region59: #{tpu_custom_call.1} parent=55 // pred_region
          %s943 = sand.u32 %s140, 1
          %s944 = scalar_lea.sflag [#allocation4], %s943
          %s945 = sand.u32 %s140, 1
          %s946 = smul.addr %s945, 16
          %s947 = scalar_lea.vmem [#allocation7], %s946
          %948 = dma.done %s944, 256
        $region60: #{tpu_custom_call.1} parent=55 // pred_fallthru
          _
      $region56: #{tpu_custom_call.1} parent=5 // pred_fallthru
        _
    $region6: #{tpu_custom_call.1} parent=1 // loop_footer
      %s20 = sadd.s32 1, %s16
    $region7: #{tpu_custom_call.1} parent=1 // loop_footer_branch
      %15 = sbr.rel target = $region3
    $region8: #{tpu_custom_call.1} parent=1 // loop_exit
      _
    %949 = vsyncpa [#allocation3], 1
    %s950 = scalar_lea.sflag [#allocation3], 1
    %951 = vsyncpa %s950, 1
    %952 = vsyncpa [#allocation6], 1
    %953 = vsyncpa [#allocation4], 1
    %s954 = scalar_lea.sflag [#allocation4], 1
    %955 = vsyncpa %s954, 1

// kernel: tpu_custom_call.1
$region0: #{tpu_custom_call.1}
  #allocation0 [shape = 'u32[]', space=smem, size = 0x4, offset = 0x4, fixed_abs, tag = 'smem constant byte address 0x4 - core index']
  #allocation1 [shape = 'u32[144,128]{1,0:T(1,128)}', space=vmem, size = 0x12000, scoped, tag = 'internal scratch']
  %s0 = inlined_call_operand.vmem [shape: f32[2,20,128], index: 0, kind: input, shape index: {}]
  %s1 = inlined_call_operand.hbm [shape: f32[3,128,128], index: 1, kind: input, shape index: {}]
  %s2 = inlined_call_operand.vmem [shape: f32[1,128], index: 2, kind: input, shape index: {}]
  %s3 = inlined_call_operand.hbm [shape: f32[3,128,128], index: 3, kind: input, shape index: {}]
  %s4 = inlined_call_operand.vmem [shape: f32[1,128], index: 4, kind: input, shape index: {}]
  %s5 = inlined_call_operand.hbm [shape: f32[2,16,128], index: 5, kind: output, shape index: {}]
  %s6 = sld [smem:[#allocation0]]
  $region61: #{tpu_custom_call.1} parent=0
    _
  %s8 = ssub.s32 1, %s6
  %s9 = scalar_select 0, %s8, %s6
  $region1: #{tpu_custom_call.1} parent=0
    #allocation2 [shape = 'u8[196608]{0}', space=vmem, size = 0x30000, scoped, tag = 'input window, operand 1, single buffered']
    #allocation3 [shape = 's32[2]{0}', space=sflag, size = 0x8, scoped, tag = 'scoped memory for tpu_custom_call.1']
    #allocation4 [shape = 's32[2]{0}', space=sflag, size = 0x8, scoped, tag = 'scoped memory for tpu_custom_call.1']
    #allocation5 [shape = 'u8[196608]{0}', space=vmem, size = 0x30000, scoped, tag = 'input window, operand 3, single buffered']
    #allocation6 [shape = 's32[1]{0}', space=sflag, size = 0x4, scoped, tag = 'scoped memory for tpu_custom_call.1']
    #allocation7 [shape = 'u8[16384]{0}', space=vmem, size = 0x4000, scoped, tag = 'output window, operand 0']
    %10 = vsyncpa [#allocation3], 0
    %11 = vsyncpa [#allocation6], 0
    %12 = vsyncpa [#allocation4], 0
    %s13 = scalar_lea.sflag [#allocation4], 1
    %14 = vsyncpa %s13, 0
    loop: start=0, step=1, limit=4
    $region2: #{tpu_custom_call.1} parent=1 // loop_pre_header
      _
    $region3: #{tpu_custom_call.1} parent=1 // loop_header
      %s16 = sphi 0, %s20
      %p17 = scmp.ge.s32.totalorder %s16, 4
      %s26 = sphi 0, %s28
      %s29 = sphi 0, %s26
      %s30 = sphi 0, %s29
      %s46 = sphi 0, %s30
      %s50 = sphi 0, %s50
      %s52 = sphi 0, %s50
      %s53 = sphi 0, %s52
      %s67 = sphi 0, %s53
      %s71 = sphi 0, %s71
      %s73 = sphi 0, %s71
      %s74 = sphi 0, %s73
      %s88 = sphi 0, %s74
      %s92 = sphi 0, %s92
      %s94 = sphi 0, %s92
      %s95 = sphi 0, %s94
      %s109 = sphi 0, %s95
      %s113 = sphi 0, %s113
      %s115 = sphi 0, %s113
      %s116 = sphi 0, %s115
      %s130 = sphi 0, %s116
      %s136 = sphi 0, %s138
      %s139 = sphi 0, %s136
      %s140 = sphi 0, %s139
      %s156 = sphi 0, %s140
    $region4: #{tpu_custom_call.1} parent=1 // loop_header_branch
      %19 = sbr.rel (%p17) target = $region8
    $region5: #{tpu_custom_call.1} parent=1 // loop_body
      %s21 = ssub.s32 %s16, 1
      %s22 = ssub.s32 %s16, 2
      %s23 = sadd.s32 %s16, 1
      %s24 = ssub.s32 %s16, %s23
      %p25 = scmp.eq.s32.totalorder %s24, 0
      %s27 = sadd.s32 %s26, 1
      %s28 = scalar_select %p25, %s26, %s27
      %p31 = pneg %p25
      %p32 = scmp.eq.s32.totalorder %s16, 1
      %p33 = por %p31, %p32
      %p34 = scmp.ne.s32.totalorder %s26, %s29
      %p35 = scmp.eq.s32.totalorder %s16, 0
      %p36 = por %p34, %p35
      %p37 = scmp.ne.s32.totalorder %s26, %s29
      %p38 = scmp.eq.s32.totalorder %s21, 1
      %p39 = por %p37, %p38
      %p40 = scmp.ne.s32.totalorder %s29, %s30
      %p41 = scmp.eq.s32.totalorder %s21, 0
      %p42 = por %p40, %p41
      %p43 = scmp.ne.s32.totalorder %s29, %s30
      %p44 = scmp.eq.s32.totalorder %s22, 1
      %p45 = por %p43, %p44
      %p47 = scmp.ne.s32.totalorder %s30, %s46
      %p48 = scmp.eq.s32.totalorder %s22, 0
      %p49 = por %p47, %p48
      %s51 = sadd.s32 %s50, 1
      %p54 = scmp.eq.s32.totalorder %s16, 1
      %p55 = scmp.ne.s32.totalorder %s50, %s52
      %p56 = scmp.eq.s32.totalorder %s16, 0
      %p57 = por %p55, %p56
      %p58 = scmp.ne.s32.totalorder %s50, %s52
      %p59 = scmp.eq.s32.totalorder %s21, 1
      %p60 = por %p58, %p59
      %p61 = scmp.ne.s32.totalorder %s52, %s53
      %p62 = scmp.eq.s32.totalorder %s21, 0
      %p63 = por %p61, %p62
      %p64 = scmp.ne.s32.totalorder %s52, %s53
      %p65 = scmp.eq.s32.totalorder %s22, 1
      %p66 = por %p64, %p65
      %p68 = scmp.ne.s32.totalorder %s53, %s67
      %p69 = scmp.eq.s32.totalorder %s22, 0
      %p70 = por %p68, %p69
      %s72 = sadd.s32 %s71, 1
      %p75 = scmp.eq.s32.totalorder %s16, 1
      %p76 = scmp.ne.s32.totalorder %s71, %s73
      %p77 = scmp.eq.s32.totalorder %s16, 0
      %p78 = por %p76, %p77
      %p79 = scmp.ne.s32.totalorder %s71, %s73
      %p80 = scmp.eq.s32.totalorder %s21, 1
      %p81 = por %p79, %p80
      %p82 = scmp.ne.s32.totalorder %s73, %s74
      %p83 = scmp.eq.s32.totalorder %s21, 0
      %p84 = por %p82, %p83
      %p85 = scmp.ne.s32.totalorder %s73, %s74
      %p86 = scmp.eq.s32.totalorder %s22, 1
      %p87 = por %p85, %p86
      %p89 = scmp.ne.s32.totalorder %s74, %s88
      %p90 = scmp.eq.s32.totalorder %s22, 0
      %p91 = por %p89, %p90
      %s93 = sadd.s32 %s92, 1
      %p96 = scmp.eq.s32.totalorder %s16, 1
      %p97 = scmp.ne.s32.totalorder %s92, %s94
      %p98 = scmp.eq.s32.totalorder %s16, 0
      %p99 = por %p97, %p98
      %p100 = scmp.ne.s32.totalorder %s92, %s94
      %p101 = scmp.eq.s32.totalorder %s21, 1
      %p102 = por %p100, %p101
      %p103 = scmp.ne.s32.totalorder %s94, %s95
      %p104 = scmp.eq.s32.totalorder %s21, 0
      %p105 = por %p103, %p104
      %p106 = scmp.ne.s32.totalorder %s94, %s95
      %p107 = scmp.eq.s32.totalorder %s22, 1
      %p108 = por %p106, %p107
      %p110 = scmp.ne.s32.totalorder %s95, %s109
      %p111 = scmp.eq.s32.totalorder %s22, 0
      %p112 = por %p110, %p111
      %s114 = sadd.s32 %s113, 1
      %p117 = scmp.eq.s32.totalorder %s16, 1
      %p118 = scmp.ne.s32.totalorder %s113, %s115
      %p119 = scmp.eq.s32.totalorder %s16, 0
      %p120 = por %p118, %p119
      %p121 = scmp.ne.s32.totalorder %s113, %s115
      %p122 = scmp.eq.s32.totalorder %s21, 1
      %p123 = por %p121, %p122
      %p124 = scmp.ne.s32.totalorder %s115, %s116
      %p125 = scmp.eq.s32.totalorder %s21, 0
      %p126 = por %p124, %p125
      %p127 = scmp.ne.s32.totalorder %s115, %s116
      %p128 = scmp.eq.s32.totalorder %s22, 1
      %p129 = por %p127, %p128
      %p131 = scmp.ne.s32.totalorder %s116, %s130
      %p132 = scmp.eq.s32.totalorder %s22, 0
      %p133 = por %p131, %p132
      %s134 = ssub.s32 %s16, %s23
      %p135 = scmp.eq.s32.totalorder %s134, 0
      %s137 = sadd.s32 %s136, 1
      %s138 = scalar_select %p135, %s136, %s137
      %p141 = pneg %p135
      %p142 = scmp.eq.s32.totalorder %s16, 1
      %p143 = por %p141, %p142
      %p144 = scmp.ne.s32.totalorder %s136, %s139
      %p145 = scmp.eq.s32.totalorder %s16, 0
      %p146 = por %p144, %p145
      %p147 = scmp.ne.s32.totalorder %s136, %s139
      %p148 = scmp.eq.s32.totalorder %s21, 1
      %p149 = por %p147, %p148
      %p150 = scmp.ne.s32.totalorder %s139, %s140
      %p151 = scmp.eq.s32.totalorder %s21, 0
      %p152 = por %p150, %p151
      %p153 = scmp.ne.s32.totalorder %s139, %s140
      %p154 = scmp.eq.s32.totalorder %s22, 1
      %p155 = por %p153, %p154
      %p157 = scmp.ne.s32.totalorder %s140, %s156
      %p158 = scmp.eq.s32.totalorder %s22, 0
      %p159 = por %p157, %p158
      %p160 = scmp.le.s32.totalorder 1, %s16
      %p161 = scmp.lt.s32.totalorder %s16, 3
      %p162 = pnand %p160, %p161
      %p163 = pneg %p162
      // Predicated region
      $region9: #{tpu_custom_call.1} parent=5 // pred_check
        _
      $region10: #{tpu_custom_call.1} parent=5 // pred_check_branch
        %165 = sbr.rel (%p162) target = $region12
      $region11: #{tpu_custom_call.1} parent=5 // pred_region
        %s166 = ssub.s32 %s16, 1
        // Predicated region
        $region13: #{tpu_custom_call.1} parent=11 // pred_check
          %p167 = pneg %p63
        $region14: #{tpu_custom_call.1} parent=11 // pred_check_branch
          %169 = sbr.rel (%p167) target = $region16
        $region15: #{tpu_custom_call.1} parent=11 // pred_region
          %s171 = ssub.s32 6144, 6144
          %172 = vsyncadd [#allocation3], %s171
          %s173 = sshll.u32 [#allocation2], 4
          %s174 = int_to_ptr.vmem [resolvable:$true] %s173
          %179 = dma.hbm_to_vmem [thread:$0]  %s1, 6144, %s174, [#allocation3], 128, 128, 8
        $region16: #{tpu_custom_call.1} parent=11 // pred_fallthru
          _
        // Predicated region
        $region17: #{tpu_custom_call.1} parent=11 // pred_check
          %p180 = pneg %p84
        $region18: #{tpu_custom_call.1} parent=11 // pred_check_branch
          %182 = sbr.rel (%p180) target = $region20
        $region19: #{tpu_custom_call.1} parent=11 // pred_region
          _
        $region20: #{tpu_custom_call.1} parent=11 // pred_fallthru
          _
        // Predicated region
        $region21: #{tpu_custom_call.1} parent=11 // pred_check
          %p183 = pneg %p105
        $region22: #{tpu_custom_call.1} parent=11 // pred_check_branch
          %185 = sbr.rel (%p183) target = $region24
        $region23: #{tpu_custom_call.1} parent=11 // pred_region
          %s187 = ssub.s32 6144, 6144
          %188 = vsyncadd [#allocation6], %s187
          %s189 = sshll.u32 [#allocation5], 4
          %s190 = int_to_ptr.vmem [resolvable:$true] %s189
          %195 = dma.hbm_to_vmem [thread:$0]  %s3, 6144, %s190, [#allocation6], 128, 128, 8
        $region24: #{tpu_custom_call.1} parent=11 // pred_fallthru
          _
        // Predicated region
        $region25: #{tpu_custom_call.1} parent=11 // pred_check
          %p196 = pneg %p126
        $region26: #{tpu_custom_call.1} parent=11 // pred_check_branch
          %198 = sbr.rel (%p196) target = $region28
        $region27: #{tpu_custom_call.1} parent=11 // pred_region
          _
        $region28: #{tpu_custom_call.1} parent=11 // pred_fallthru
          _
      $region12: #{tpu_custom_call.1} parent=5 // pred_fallthru
        _
      %p199 = scmp.lt.s32.totalorder %s16, 2
      // Predicated region
      $region29: #{tpu_custom_call.1} parent=5 // pred_check
        %p200 = pneg %p199
      $region30: #{tpu_custom_call.1} parent=5 // pred_check_branch
        %202 = sbr.rel (%p200) target = $region32
      $region31: #{tpu_custom_call.1} parent=5 // pred_region
        // Predicated region
        $region33: #{tpu_custom_call.1} parent=31 // pred_check
          %p203 = pneg %p36
        $region34: #{tpu_custom_call.1} parent=31 // pred_check_branch
          %205 = sbr.rel (%p203) target = $region36
        $region35: #{tpu_custom_call.1} parent=31 // pred_region
          %p206 = scmp.lt.s32.totalorder %s16, 1
          %s207 = scalar_select %p206, %s16, 1
          %s208 = smul.addr %s207, 3
          %s209 = smul.addr %s208, 8
          %s210 = scalar_lea.vmem %s0, %s209
        $region36: #{tpu_custom_call.1} parent=31 // pred_fallthru
          _
      $region32: #{tpu_custom_call.1} parent=5 // pred_fallthru
        _
      %p211 = scmp.le.s32.totalorder 1, %s16
      %p212 = scmp.lt.s32.totalorder %s16, 3
      %p213 = pnand %p211, %p212
      %p214 = pneg %p213
      // Predicated region
      $region37: #{tpu_custom_call.1} parent=5 // pred_check
        _
      $region38: #{tpu_custom_call.1} parent=5 // pred_check_branch
        %216 = sbr.rel (%p213) target = $region40
      $region39: #{tpu_custom_call.1} parent=5 // pred_region
        %s217 = ssub.s32 %s16, 1
        // Predicated region
        $region41: #{tpu_custom_call.1} parent=39 // pred_check
          %p218 = pneg %p63
        $region42: #{tpu_custom_call.1} parent=39 // pred_check_branch
          %220 = sbr.rel (%p218) target = $region44
        $region43: #{tpu_custom_call.1} parent=39 // pred_region
          %221 = dma.done [#allocation3], 6144
        $region44: #{tpu_custom_call.1} parent=39 // pred_fallthru
          _
        // Predicated region
        $region45: #{tpu_custom_call.1} parent=39 // pred_check
          %p222 = pneg %p105
        $region46: #{tpu_custom_call.1} parent=39 // pred_check_branch
          %224 = sbr.rel (%p222) target = $region48
        $region47: #{tpu_custom_call.1} parent=39 // pred_region
          %225 = dma.done [#allocation6], 6144
        $region48: #{tpu_custom_call.1} parent=39 // pred_fallthru
          _
        %p226 = scmp.lt.s32.totalorder %s21, 1
        %s227 = scalar_select %p226, %s21, 1
        %s228 = smul.addr %s227, 3
        %s229 = smul.addr %s228, 8
        %s230 = scalar_lea.vmem %s0, %s229
        %p231 = pneg %p42
        %p232 = pneg %p39
        %p233 = pneg %p63
        %p234 = pneg %p60
        %p235 = pneg %p84
        %p236 = pneg %p81
        %p237 = pneg %p105
        %p238 = pneg %p102
        %p239 = pneg %p126
        %p240 = pneg %p123
        %p241 = pneg %p152
        %p242 = pneg %p149
        %s243 = sand.u32 %s139, 1
        %s244 = scalar_lea.sflag [#allocation4], %s243
        %s245 = sand.u32 %s139, 1
        %s246 = smul.addr %s245, 16
        %s247 = scalar_lea.vmem [#allocation7], %s246
        %p248 = scmp.lt.s32.totalorder %s21, 1
        %s249 = scalar_select %p248, %s21, 1
        %s250 = smul.addr %s249, 3
        %s251 = smul.addr %s250, 8
        %s252 = scalar_lea.vmem %s0, %s251
        %v253 = vld [vmem:[%s252] sm:$0xff]
        %v254 = vld [vmem:[%s252 + $0x8] sm:$0xff]
        %v255 = vld [vmem:[%s252 + $0x10] sm:$0xf]
        %v256 = vld [vmem:[#allocation2] sm:$0xff]
        %v257 = vld [vmem:[#allocation2 + $0x8] sm:$0xff]
        %v258 = vld [vmem:[#allocation2 + $0x10] sm:$0xff]
        %v259 = vld [vmem:[#allocation2 + $0x18] sm:$0xff]
        %v260 = vld [vmem:[#allocation2 + $0x20] sm:$0xff]
        %v261 = vld [vmem:[#allocation2 + $0x28] sm:$0xff]
        %v262 = vld [vmem:[#allocation2 + $0x30] sm:$0xff]
        %v263 = vld [vmem:[#allocation2 + $0x38] sm:$0xff]
        %v264 = vld [vmem:[#allocation2 + $0x40] sm:$0xff]
        %v265 = vld [vmem:[#allocation2 + $0x48] sm:$0xff]
        %v266 = vld [vmem:[#allocation2 + $0x50] sm:$0xff]
        %v267 = vld [vmem:[#allocation2 + $0x58] sm:$0xff]
        %v268 = vld [vmem:[#allocation2 + $0x60] sm:$0xff]
        %v269 = vld [vmem:[#allocation2 + $0x68] sm:$0xff]
        %v270 = vld [vmem:[#allocation2 + $0x70] sm:$0xff]
        %v271 = vld [vmem:[#allocation2 + $0x78] sm:$0xff]
        %s272 = scalar_lea.vmem [#allocation2], 128
        %v273 = vld [vmem:[%s272] sm:$0xff]
        %v274 = vld [vmem:[%s272 + $0x8] sm:$0xff]
        %v275 = vld [vmem:[%s272 + $0x10] sm:$0xff]
        %v276 = vld [vmem:[%s272 + $0x18] sm:$0xff]
        %v277 = vld [vmem:[%s272 + $0x20] sm:$0xff]
        %v278 = vld [vmem:[%s272 + $0x28] sm:$0xff]
        %v279 = vld [vmem:[%s272 + $0x30] sm:$0xff]
        %v280 = vld [vmem:[%s272 + $0x38] sm:$0xff]
        %v281 = vld [vmem:[%s272 + $0x40] sm:$0xff]
        %v282 = vld [vmem:[%s272 + $0x48] sm:$0xff]
        %v283 = vld [vmem:[%s272 + $0x50] sm:$0xff]
        %v284 = vld [vmem:[%s272 + $0x58] sm:$0xff]
        %v285 = vld [vmem:[%s272 + $0x60] sm:$0xff]
        %v286 = vld [vmem:[%s272 + $0x68] sm:$0xff]
        %v287 = vld [vmem:[%s272 + $0x70] sm:$0xff]
        %v288 = vld [vmem:[%s272 + $0x78] sm:$0xff]
        %vm292 = vcmask 1046528
        %v293 = vrot.slane %v253, 1
        %v294 = vrot.slane %v254, 1
        %v295 = vsel %vm292, %v293, %v294
        %v296 = vrot.slane %v255, 1
        %v297 = vsel %vm292, %v294, %v296
        %301 = vmatprep.subr.mxu0 0.0
        %302 = vmatpush1.msra.mxu0 %v288
        %303 = vmatprep.subr.mxu0 0.0
        %304 = vmatpush1.msra.mxu0 %v287
        %305 = vmatprep.subr.mxu0 0.0
        %306 = vmatpush1.msra.mxu0 %v286
        %307 = vmatprep.subr.mxu0 0.0
        %308 = vmatpush1.msra.mxu0 %v285
        %309 = vmatprep.subr.mxu0 0.0
        %310 = vmatpush1.msra.mxu0 %v284
        %311 = vmatprep.subr.mxu0 0.0
        %312 = vmatpush1.msra.mxu0 %v283
        %313 = vmatprep.subr.mxu0 0.0
        %314 = vmatpush1.msra.mxu0 %v282
        %315 = vmatprep.subr.mxu0 0.0
        %316 = vmatpush1.msra.mxu0 %v281
        %317 = vmatprep.subr.mxu0 0.0
        %318 = vmatpush1.msra.mxu0 %v280
        %319 = vmatprep.subr.mxu0 0.0
        %320 = vmatpush1.msra.mxu0 %v279
        %321 = vmatprep.subr.mxu0 0.0
        %322 = vmatpush1.msra.mxu0 %v278
        %323 = vmatprep.subr.mxu0 0.0
        %324 = vmatpush1.msra.mxu0 %v277
        %325 = vmatprep.subr.mxu0 0.0
        %326 = vmatpush1.msra.mxu0 %v276
        %327 = vmatprep.subr.mxu0 0.0
        %328 = vmatpush1.msra.mxu0 %v275
        %329 = vmatprep.subr.mxu0 0.0
        %330 = vmatpush1.msra.mxu0 %v274
        %331 = vmatprep.subr.mxu0 0.0
        %332 = vmatpush1.msra.mxu0 %v273
        %333 = vmatprep.subr.mxu0 0.0
        %334 = vmatpush2.msra.mxu0 0.0
        %335 = vmatprep.subr.mxu0 0.0
        %336 = vmatpush2.msra.mxu0 0.0
        %337 = vmatprep.subr.mxu0 0.0
        %338 = vmatpush2.msra.mxu0 0.0
        %339 = vmatprep.subr.mxu0 0.0
        %340 = vmatpush2.msra.mxu0 0.0
        %341 = vmatprep.subr.mxu0 0.0
        %342 = vmatpush2.msra.mxu0 0.0
        %343 = vmatprep.subr.mxu0 0.0
        %344 = vmatpush2.msra.mxu0 0.0
        %345 = vmatprep.subr.mxu0 0.0
        %346 = vmatpush2.msra.mxu0 0.0
        %347 = vmatprep.subr.mxu0 0.0
        %348 = vmatpush2.msra.mxu0 0.0
        %349 = vmatprep.subr.mxu0 0.0
        %350 = vmatpush2.msra.mxu0 0.0
        %351 = vmatprep.subr.mxu0 0.0
        %352 = vmatpush2.msra.mxu0 0.0
        %353 = vmatprep.subr.mxu0 0.0
        %354 = vmatpush2.msra.mxu0 0.0
        %355 = vmatprep.subr.mxu0 0.0
        %356 = vmatpush2.msra.mxu0 0.0
        %357 = vmatprep.subr.mxu0 0.0
        %358 = vmatpush2.msra.mxu0 0.0
        %359 = vmatprep.subr.mxu0 0.0
        %360 = vmatpush2.msra.mxu0 0.0
        %361 = vmatprep.subr.mxu0 0.0
        %362 = vmatpush2.msra.mxu0 0.0
        %363 = vmatprep.subr.mxu0 0.0
        %364 = vmatpush2.msra.mxu0 0.0
        %365 = vmatprep.mubr.f32.mxu0 0.0
        %366 = vmatmul.mubr.f32.gmra.mxu0 %v295
        %v367 = vpop.f32.mrf.mxu0
        %v368 = vadd.f32 0.0, %v367
        %v369 = vpop.f32.mrf.mxu0
        %370 = vmatprep.mubr.f32.mxu0 0.0
        %371 = vmatmul.mubr.f32.gmra.mxu0 %v297
        %v372 = vpop.f32.mrf.mxu0
        %v373 = vadd.f32 0.0, %v372
        %v374 = vpop.f32.mrf.mxu0
        %375 = vmatprep.mubr.f32.mxu0 0.0
        %376 = vmatmul.mubr.f32.gmra.mxu0 %v296
        %v377 = vpop.f32.mrf.mxu0
        %v378 = vadd.f32 0.0, %v377
        %v379 = vpop.f32.mrf.mxu0
        %380 = vdwg.mxu0
        %381 = vmatprep.subr.mxu0 0.0
        %382 = vmatpush1.msra.mxu0 %v271
        %383 = vmatprep.subr.mxu0 0.0
        %384 = vmatpush1.msra.mxu0 %v270
        %385 = vmatprep.subr.mxu0 0.0
        %386 = vmatpush1.msra.mxu0 %v269
        %387 = vmatprep.subr.mxu0 0.0
        %388 = vmatpush1.msra.mxu0 %v268
        %389 = vmatprep.subr.mxu0 0.0
        %390 = vmatpush1.msra.mxu0 %v267
        %391 = vmatprep.subr.mxu0 0.0
        %392 = vmatpush1.msra.mxu0 %v266
        %393 = vmatprep.subr.mxu0 0.0
        %394 = vmatpush1.msra.mxu0 %v265
        %395 = vmatprep.subr.mxu0 0.0
        %396 = vmatpush1.msra.mxu0 %v264
        %397 = vmatprep.subr.mxu0 0.0
        %398 = vmatpush1.msra.mxu0 %v263
        %399 = vmatprep.subr.mxu0 0.0
        %400 = vmatpush1.msra.mxu0 %v262
        %401 = vmatprep.subr.mxu0 0.0
        %402 = vmatpush1.msra.mxu0 %v261
        %403 = vmatprep.subr.mxu0 0.0
        %404 = vmatpush1.msra.mxu0 %v260
        %405 = vmatprep.subr.mxu0 0.0
        %406 = vmatpush1.msra.mxu0 %v259
        %407 = vmatprep.subr.mxu0 0.0
        %408 = vmatpush1.msra.mxu0 %v258
        %409 = vmatprep.subr.mxu0 0.0
        %410 = vmatpush1.msra.mxu0 %v257
        %411 = vmatprep.subr.mxu0 0.0
        %412 = vmatpush1.msra.mxu0 %v256
        %413 = vmatprep.subr.mxu0 0.0
        %414 = vmatpush2.msra.mxu0 0.0
        %415 = vmatprep.subr.mxu0 0.0
        %416 = vmatpush2.msra.mxu0 0.0
        %417 = vmatprep.subr.mxu0 0.0
        %418 = vmatpush2.msra.mxu0 0.0
        %419 = vmatprep.subr.mxu0 0.0
        %420 = vmatpush2.msra.mxu0 0.0
        %421 = vmatprep.subr.mxu0 0.0
        %422 = vmatpush2.msra.mxu0 0.0
        %423 = vmatprep.subr.mxu0 0.0
        %424 = vmatpush2.msra.mxu0 0.0
        %425 = vmatprep.subr.mxu0 0.0
        %426 = vmatpush2.msra.mxu0 0.0
        %427 = vmatprep.subr.mxu0 0.0
        %428 = vmatpush2.msra.mxu0 0.0
        %429 = vmatprep.subr.mxu0 0.0
        %430 = vmatpush2.msra.mxu0 0.0
        %431 = vmatprep.subr.mxu0 0.0
        %432 = vmatpush2.msra.mxu0 0.0
        %433 = vmatprep.subr.mxu0 0.0
        %434 = vmatpush2.msra.mxu0 0.0
        %435 = vmatprep.subr.mxu0 0.0
        %436 = vmatpush2.msra.mxu0 0.0
        %437 = vmatprep.subr.mxu0 0.0
        %438 = vmatpush2.msra.mxu0 0.0
        %439 = vmatprep.subr.mxu0 0.0
        %440 = vmatpush2.msra.mxu0 0.0
        %441 = vmatprep.subr.mxu0 0.0
        %442 = vmatpush2.msra.mxu0 0.0
        %443 = vmatprep.subr.mxu0 0.0
        %444 = vmatpush2.msra.mxu0 0.0
        %445 = vmatprep.mubr.f32.mxu0 0.0
        %446 = vmatmul.mubr.f32.gmra.mxu0 %v253
        %v447 = vpop.f32.mrf.mxu0
        %v448 = vadd.f32 %v368, %v447
        %v449 = vpop.f32.mrf.mxu0
        %450 = vmatprep.mubr.f32.mxu0 0.0
        %451 = vmatmul.mubr.f32.gmra.mxu0 %v254
        %v452 = vpop.f32.mrf.mxu0
        %v453 = vadd.f32 %v373, %v452
        %v454 = vpop.f32.mrf.mxu0
        %455 = vmatprep.mubr.f32.mxu0 0.0
        %456 = vmatmul.mubr.f32.gmra.mxu0 %v255
        %v457 = vpop.f32.mrf.mxu0
        %v458 = vadd.f32 %v378, %v457
        %v459 = vpop.f32.mrf.mxu0
        %460 = vdwg.mxu0
        %s461 = scalar_lea.vmem [#allocation2], 256
        %v462 = vld [vmem:[%s461] sm:$0xff]
        %v463 = vld [vmem:[%s461 + $0x8] sm:$0xff]
        %v464 = vld [vmem:[%s461 + $0x10] sm:$0xff]
        %v465 = vld [vmem:[%s461 + $0x18] sm:$0xff]
        %v466 = vld [vmem:[%s461 + $0x20] sm:$0xff]
        %v467 = vld [vmem:[%s461 + $0x28] sm:$0xff]
        %v468 = vld [vmem:[%s461 + $0x30] sm:$0xff]
        %v469 = vld [vmem:[%s461 + $0x38] sm:$0xff]
        %v470 = vld [vmem:[%s461 + $0x40] sm:$0xff]
        %v471 = vld [vmem:[%s461 + $0x48] sm:$0xff]
        %v472 = vld [vmem:[%s461 + $0x50] sm:$0xff]
        %v473 = vld [vmem:[%s461 + $0x58] sm:$0xff]
        %v474 = vld [vmem:[%s461 + $0x60] sm:$0xff]
        %v475 = vld [vmem:[%s461 + $0x68] sm:$0xff]
        %v476 = vld [vmem:[%s461 + $0x70] sm:$0xff]
        %v477 = vld [vmem:[%s461 + $0x78] sm:$0xff]
        %vm478 = vcmask 1045504
        %v479 = vrot.slane %v253, 2
        %v480 = vrot.slane %v254, 2
        %v481 = vsel %vm478, %v479, %v480
        %v482 = vrot.slane %v255, 2
        %v483 = vsel %vm478, %v480, %v482
        %487 = vmatprep.subr.mxu0 0.0
        %488 = vmatpush1.msra.mxu0 %v477
        %489 = vmatprep.subr.mxu0 0.0
        %490 = vmatpush1.msra.mxu0 %v476
        %491 = vmatprep.subr.mxu0 0.0
        %492 = vmatpush1.msra.mxu0 %v475
        %493 = vmatprep.subr.mxu0 0.0
        %494 = vmatpush1.msra.mxu0 %v474
        %495 = vmatprep.subr.mxu0 0.0
        %496 = vmatpush1.msra.mxu0 %v473
        %497 = vmatprep.subr.mxu0 0.0
        %498 = vmatpush1.msra.mxu0 %v472
        %499 = vmatprep.subr.mxu0 0.0
        %500 = vmatpush1.msra.mxu0 %v471
        %501 = vmatprep.subr.mxu0 0.0
        %502 = vmatpush1.msra.mxu0 %v470
        %503 = vmatprep.subr.mxu0 0.0
        %504 = vmatpush1.msra.mxu0 %v469
        %505 = vmatprep.subr.mxu0 0.0
        %506 = vmatpush1.msra.mxu0 %v468
        %507 = vmatprep.subr.mxu0 0.0
        %508 = vmatpush1.msra.mxu0 %v467
        %509 = vmatprep.subr.mxu0 0.0
        %510 = vmatpush1.msra.mxu0 %v466
        %511 = vmatprep.subr.mxu0 0.0
        %512 = vmatpush1.msra.mxu0 %v465
        %513 = vmatprep.subr.mxu0 0.0
        %514 = vmatpush1.msra.mxu0 %v464
        %515 = vmatprep.subr.mxu0 0.0
        %516 = vmatpush1.msra.mxu0 %v463
        %517 = vmatprep.subr.mxu0 0.0
        %518 = vmatpush1.msra.mxu0 %v462
        %519 = vmatprep.subr.mxu0 0.0
        %520 = vmatpush2.msra.mxu0 0.0
        %521 = vmatprep.subr.mxu0 0.0
        %522 = vmatpush2.msra.mxu0 0.0
        %523 = vmatprep.subr.mxu0 0.0
        %524 = vmatpush2.msra.mxu0 0.0
        %525 = vmatprep.subr.mxu0 0.0
        %526 = vmatpush2.msra.mxu0 0.0
        %527 = vmatprep.subr.mxu0 0.0
        %528 = vmatpush2.msra.mxu0 0.0
        %529 = vmatprep.subr.mxu0 0.0
        %530 = vmatpush2.msra.mxu0 0.0
        %531 = vmatprep.subr.mxu0 0.0
        %532 = vmatpush2.msra.mxu0 0.0
        %533 = vmatprep.subr.mxu0 0.0
        %534 = vmatpush2.msra.mxu0 0.0
        %535 = vmatprep.subr.mxu0 0.0
        %536 = vmatpush2.msra.mxu0 0.0
        %537 = vmatprep.subr.mxu0 0.0
        %538 = vmatpush2.msra.mxu0 0.0
        %539 = vmatprep.subr.mxu0 0.0
        %540 = vmatpush2.msra.mxu0 0.0
        %541 = vmatprep.subr.mxu0 0.0
        %542 = vmatpush2.msra.mxu0 0.0
        %543 = vmatprep.subr.mxu0 0.0
        %544 = vmatpush2.msra.mxu0 0.0
        %545 = vmatprep.subr.mxu0 0.0
        %546 = vmatpush2.msra.mxu0 0.0
        %547 = vmatprep.subr.mxu0 0.0
        %548 = vmatpush2.msra.mxu0 0.0
        %549 = vmatprep.subr.mxu0 0.0
        %550 = vmatpush2.msra.mxu0 0.0
        %551 = vmatprep.mubr.f32.mxu0 0.0
        %552 = vmatmul.mubr.f32.gmra.mxu0 %v481
        %v553 = vpop.f32.mrf.mxu0
        %v554 = vadd.f32 0.0, %v553
        %v555 = vpop.f32.mrf.mxu0
        %556 = vmatprep.mubr.f32.mxu0 0.0
        %557 = vmatmul.mubr.f32.gmra.mxu0 %v483
        %v558 = vpop.f32.mrf.mxu0
        %v559 = vadd.f32 0.0, %v558
        %v560 = vpop.f32.mrf.mxu0
        %561 = vmatprep.mubr.f32.mxu0 0.0
        %562 = vmatmul.mubr.f32.gmra.mxu0 %v482
        %v563 = vpop.f32.mrf.mxu0
        %v564 = vadd.f32 0.0, %v563
        %v565 = vpop.f32.mrf.mxu0
        %566 = vdwg.mxu0
        %v567 = vadd.f32 %v448, %v554
        %v568 = vadd.f32 %v453, %v559
        %v569 = vadd.f32 %v458, %v564
        %v570 = vld [vmem:[%s2] sm:$0x1]
        %v572 = vlaneseq
        %v573 = vshrl.u32 %v572, 7
        %v574 = vsub.s32 0, %v573
        %v575 = vrot.slane %v570, %v574
        %v577 = vadd.f32 %v567, %v575
        %v578 = vadd.f32 %v568, %v575
        %v579 = vadd.f32 %v569, %v575
        %v580 = vtanh.pop %v577
        %v581 = vtanh.pop %v578
        %v582 = vtanh.pop %v579
        %v583 = vlaneseq
        %v584 = vshrl.u32 %v583, 7
        %v585 = vadd.s32 %v584, 8
        %v586 = vadd.s32 %v584, 16
        %vm587 = vcmp.ge.s32.totalorder %v584, 1
        %vm588 = vcmp.ge.s32.totalorder %v585, 1
        %vm589 = vcmp.ge.s32.totalorder %v586, 1
        %vm590 = vcmp.le.s32.totalorder %v584, 16
        %vm591 = vcmp.le.s32.totalorder %v585, 16
        %vm592 = vcmp.le.s32.totalorder %v586, 16
        %vm593 = vmand %vm587, %vm590
        %vm594 = vmand %vm588, %vm591
        %vm595 = vmand %vm589, %vm592
        %v596 = vsel %vm593, 1, 0
        %v597 = vsel %vm594, 1, 0
        %v598 = vsel %vm595, 1, 0
        %vm599 = vcmp.eq.s32.totalorder %v596, 1
        %vm600 = vcmp.eq.s32.totalorder %v597, 1
        %vm601 = vcmp.eq.s32.totalorder %v598, 1
        %v602 = vsel %vm599, %v580, 0.0
        %v603 = vsel %vm600, %v581, 0.0
        %v604 = vsel %vm601, %v582, 0.0
        %v605 = vld [vmem:[#allocation5] sm:$0xff]
        %v606 = vld [vmem:[#allocation5 + $0x8] sm:$0xff]
        %v607 = vld [vmem:[#allocation5 + $0x10] sm:$0xff]
        %v608 = vld [vmem:[#allocation5 + $0x18] sm:$0xff]
        %v609 = vld [vmem:[#allocation5 + $0x20] sm:$0xff]
        %v610 = vld [vmem:[#allocation5 + $0x28] sm:$0xff]
        %v611 = vld [vmem:[#allocation5 + $0x30] sm:$0xff]
        %v612 = vld [vmem:[#allocation5 + $0x38] sm:$0xff]
        %v613 = vld [vmem:[#allocation5 + $0x40] sm:$0xff]
        %v614 = vld [vmem:[#allocation5 + $0x48] sm:$0xff]
        %v615 = vld [vmem:[#allocation5 + $0x50] sm:$0xff]
        %v616 = vld [vmem:[#allocation5 + $0x58] sm:$0xff]
        %v617 = vld [vmem:[#allocation5 + $0x60] sm:$0xff]
        %v618 = vld [vmem:[#allocation5 + $0x68] sm:$0xff]
        %v619 = vld [vmem:[#allocation5 + $0x70] sm:$0xff]
        %v620 = vld [vmem:[#allocation5 + $0x78] sm:$0xff]
        %s621 = scalar_lea.vmem [#allocation5], 128
        %v622 = vld [vmem:[%s621] sm:$0xff]
        %v623 = vld [vmem:[%s621 + $0x8] sm:$0xff]
        %v624 = vld [vmem:[%s621 + $0x10] sm:$0xff]
        %v625 = vld [vmem:[%s621 + $0x18] sm:$0xff]
        %v626 = vld [vmem:[%s621 + $0x20] sm:$0xff]
        %v627 = vld [vmem:[%s621 + $0x28] sm:$0xff]
        %v628 = vld [vmem:[%s621 + $0x30] sm:$0xff]
        %v629 = vld [vmem:[%s621 + $0x38] sm:$0xff]
        %v630 = vld [vmem:[%s621 + $0x40] sm:$0xff]
        %v631 = vld [vmem:[%s621 + $0x48] sm:$0xff]
        %v632 = vld [vmem:[%s621 + $0x50] sm:$0xff]
        %v633 = vld [vmem:[%s621 + $0x58] sm:$0xff]
        %v634 = vld [vmem:[%s621 + $0x60] sm:$0xff]
        %v635 = vld [vmem:[%s621 + $0x68] sm:$0xff]
        %v636 = vld [vmem:[%s621 + $0x70] sm:$0xff]
        %v637 = vld [vmem:[%s621 + $0x78] sm:$0xff]
        %v641 = vrot.slane %v602, 1
        %v642 = vrot.slane %v603, 1
        %v643 = vsel %vm292, %v641, %v642
        %v644 = vrot.slane %v604, 1
        %v645 = vsel %vm292, %v642, %v644
        %648 = vmatprep.subr.mxu0 0.0
        %649 = vmatpush1.msra.mxu0 %v637
        %650 = vmatprep.subr.mxu0 0.0
        %651 = vmatpush1.msra.mxu0 %v636
        %652 = vmatprep.subr.mxu0 0.0
        %653 = vmatpush1.msra.mxu0 %v635
        %654 = vmatprep.subr.mxu0 0.0
        %655 = vmatpush1.msra.mxu0 %v634
        %656 = vmatprep.subr.mxu0 0.0
        %657 = vmatpush1.msra.mxu0 %v633
        %658 = vmatprep.subr.mxu0 0.0
        %659 = vmatpush1.msra.mxu0 %v632
        %660 = vmatprep.subr.mxu0 0.0
        %661 = vmatpush1.msra.mxu0 %v631
        %662 = vmatprep.subr.mxu0 0.0
        %663 = vmatpush1.msra.mxu0 %v630
        %664 = vmatprep.subr.mxu0 0.0
        %665 = vmatpush1.msra.mxu0 %v629
        %666 = vmatprep.subr.mxu0 0.0
        %667 = vmatpush1.msra.mxu0 %v628
        %668 = vmatprep.subr.mxu0 0.0
        %669 = vmatpush1.msra.mxu0 %v627
        %670 = vmatprep.subr.mxu0 0.0
        %671 = vmatpush1.msra.mxu0 %v626
        %672 = vmatprep.subr.mxu0 0.0
        %673 = vmatpush1.msra.mxu0 %v625
        %674 = vmatprep.subr.mxu0 0.0
        %675 = vmatpush1.msra.mxu0 %v624
        %676 = vmatprep.subr.mxu0 0.0
        %677 = vmatpush1.msra.mxu0 %v623
        %678 = vmatprep.subr.mxu0 0.0
        %679 = vmatpush1.msra.mxu0 %v622
        %680 = vmatprep.subr.mxu0 0.0
        %681 = vmatpush2.msra.mxu0 0.0
        %682 = vmatprep.subr.mxu0 0.0
        %683 = vmatpush2.msra.mxu0 0.0
        %684 = vmatprep.subr.mxu0 0.0
        %685 = vmatpush2.msra.mxu0 0.0
        %686 = vmatprep.subr.mxu0 0.0
        %687 = vmatpush2.msra.mxu0 0.0
        %688 = vmatprep.subr.mxu0 0.0
        %689 = vmatpush2.msra.mxu0 0.0
        %690 = vmatprep.subr.mxu0 0.0
        %691 = vmatpush2.msra.mxu0 0.0
        %692 = vmatprep.subr.mxu0 0.0
        %693 = vmatpush2.msra.mxu0 0.0
        %694 = vmatprep.subr.mxu0 0.0
        %695 = vmatpush2.msra.mxu0 0.0
        %696 = vmatprep.subr.mxu0 0.0
        %697 = vmatpush2.msra.mxu0 0.0
        %698 = vmatprep.subr.mxu0 0.0
        %699 = vmatpush2.msra.mxu0 0.0
        %700 = vmatprep.subr.mxu0 0.0
        %701 = vmatpush2.msra.mxu0 0.0
        %702 = vmatprep.subr.mxu0 0.0
        %703 = vmatpush2.msra.mxu0 0.0
        %704 = vmatprep.subr.mxu0 0.0
        %705 = vmatpush2.msra.mxu0 0.0
        %706 = vmatprep.subr.mxu0 0.0
        %707 = vmatpush2.msra.mxu0 0.0
        %708 = vmatprep.subr.mxu0 0.0
        %709 = vmatpush2.msra.mxu0 0.0
        %710 = vmatprep.subr.mxu0 0.0
        %711 = vmatpush2.msra.mxu0 0.0
        %712 = vmatprep.mubr.f32.mxu0 0.0
        %713 = vmatmul.mubr.f32.gmra.mxu0 %v643
        %v714 = vpop.f32.mrf.mxu0
        %v715 = vadd.f32 0.0, %v714
        %v716 = vpop.f32.mrf.mxu0
        %717 = vmatprep.mubr.f32.mxu0 0.0
        %718 = vmatmul.mubr.f32.gmra.mxu0 %v645
        %v719 = vpop.f32.mrf.mxu0
        %v720 = vadd.f32 0.0, %v719
        %v721 = vpop.f32.mrf.mxu0
        %722 = vdwg.mxu0
        %723 = vmatprep.subr.mxu0 0.0
        %724 = vmatpush1.msra.mxu0 %v620
        %725 = vmatprep.subr.mxu0 0.0
        %726 = vmatpush1.msra.mxu0 %v619
        %727 = vmatprep.subr.mxu0 0.0
        %728 = vmatpush1.msra.mxu0 %v618
        %729 = vmatprep.subr.mxu0 0.0
        %730 = vmatpush1.msra.mxu0 %v617
        %731 = vmatprep.subr.mxu0 0.0
        %732 = vmatpush1.msra.mxu0 %v616
        %733 = vmatprep.subr.mxu0 0.0
        %734 = vmatpush1.msra.mxu0 %v615
        %735 = vmatprep.subr.mxu0 0.0
        %736 = vmatpush1.msra.mxu0 %v614
        %737 = vmatprep.subr.mxu0 0.0
        %738 = vmatpush1.msra.mxu0 %v613
        %739 = vmatprep.subr.mxu0 0.0
        %740 = vmatpush1.msra.mxu0 %v612
        %741 = vmatprep.subr.mxu0 0.0
        %742 = vmatpush1.msra.mxu0 %v611
        %743 = vmatprep.subr.mxu0 0.0
        %744 = vmatpush1.msra.mxu0 %v610
        %745 = vmatprep.subr.mxu0 0.0
        %746 = vmatpush1.msra.mxu0 %v609
        %747 = vmatprep.subr.mxu0 0.0
        %748 = vmatpush1.msra.mxu0 %v608
        %749 = vmatprep.subr.mxu0 0.0
        %750 = vmatpush1.msra.mxu0 %v607
        %751 = vmatprep.subr.mxu0 0.0
        %752 = vmatpush1.msra.mxu0 %v606
        %753 = vmatprep.subr.mxu0 0.0
        %754 = vmatpush1.msra.mxu0 %v605
        %755 = vmatprep.subr.mxu0 0.0
        %756 = vmatpush2.msra.mxu0 0.0
        %757 = vmatprep.subr.mxu0 0.0
        %758 = vmatpush2.msra.mxu0 0.0
        %759 = vmatprep.subr.mxu0 0.0
        %760 = vmatpush2.msra.mxu0 0.0
        %761 = vmatprep.subr.mxu0 0.0
        %762 = vmatpush2.msra.mxu0 0.0
        %763 = vmatprep.subr.mxu0 0.0
        %764 = vmatpush2.msra.mxu0 0.0
        %765 = vmatprep.subr.mxu0 0.0
        %766 = vmatpush2.msra.mxu0 0.0
        %767 = vmatprep.subr.mxu0 0.0
        %768 = vmatpush2.msra.mxu0 0.0
        %769 = vmatprep.subr.mxu0 0.0
        %770 = vmatpush2.msra.mxu0 0.0
        %771 = vmatprep.subr.mxu0 0.0
        %772 = vmatpush2.msra.mxu0 0.0
        %773 = vmatprep.subr.mxu0 0.0
        %774 = vmatpush2.msra.mxu0 0.0
        %775 = vmatprep.subr.mxu0 0.0
        %776 = vmatpush2.msra.mxu0 0.0
        %777 = vmatprep.subr.mxu0 0.0
        %778 = vmatpush2.msra.mxu0 0.0
        %779 = vmatprep.subr.mxu0 0.0
        %780 = vmatpush2.msra.mxu0 0.0
        %781 = vmatprep.subr.mxu0 0.0
        %782 = vmatpush2.msra.mxu0 0.0
        %783 = vmatprep.subr.mxu0 0.0
        %784 = vmatpush2.msra.mxu0 0.0
        %785 = vmatprep.subr.mxu0 0.0
        %786 = vmatpush2.msra.mxu0 0.0
        %787 = vmatprep.mubr.f32.mxu0 0.0
        %788 = vmatmul.mubr.f32.gmra.mxu0 %v602
        %v789 = vpop.f32.mrf.mxu0
        %v790 = vadd.f32 %v715, %v789
        %v791 = vpop.f32.mrf.mxu0
        %792 = vmatprep.mubr.f32.mxu0 0.0
        %793 = vmatmul.mubr.f32.gmra.mxu0 %v603
        %v794 = vpop.f32.mrf.mxu0
        %v795 = vadd.f32 %v720, %v794
        %v796 = vpop.f32.mrf.mxu0
        %797 = vdwg.mxu0
        %s798 = scalar_lea.vmem [#allocation5], 256
        %v799 = vld [vmem:[%s798] sm:$0xff]
        %v800 = vld [vmem:[%s798 + $0x8] sm:$0xff]
        %v801 = vld [vmem:[%s798 + $0x10] sm:$0xff]
        %v802 = vld [vmem:[%s798 + $0x18] sm:$0xff]
        %v803 = vld [vmem:[%s798 + $0x20] sm:$0xff]
        %v804 = vld [vmem:[%s798 + $0x28] sm:$0xff]
        %v805 = vld [vmem:[%s798 + $0x30] sm:$0xff]
        %v806 = vld [vmem:[%s798 + $0x38] sm:$0xff]
        %v807 = vld [vmem:[%s798 + $0x40] sm:$0xff]
        %v808 = vld [vmem:[%s798 + $0x48] sm:$0xff]
        %v809 = vld [vmem:[%s798 + $0x50] sm:$0xff]
        %v810 = vld [vmem:[%s798 + $0x58] sm:$0xff]
        %v811 = vld [vmem:[%s798 + $0x60] sm:$0xff]
        %v812 = vld [vmem:[%s798 + $0x68] sm:$0xff]
        %v813 = vld [vmem:[%s798 + $0x70] sm:$0xff]
        %v814 = vld [vmem:[%s798 + $0x78] sm:$0xff]
        %v815 = vrot.slane %v602, 2
        %v816 = vrot.slane %v603, 2
        %v817 = vsel %vm478, %v815, %v816
        %v818 = vrot.slane %v604, 2
        %v819 = vsel %vm478, %v816, %v818
        %822 = vmatprep.subr.mxu0 0.0
        %823 = vmatpush1.msra.mxu0 %v814
        %824 = vmatprep.subr.mxu0 0.0
        %825 = vmatpush1.msra.mxu0 %v813
        %826 = vmatprep.subr.mxu0 0.0
        %827 = vmatpush1.msra.mxu0 %v812
        %828 = vmatprep.subr.mxu0 0.0
        %829 = vmatpush1.msra.mxu0 %v811
        %830 = vmatprep.subr.mxu0 0.0
        %831 = vmatpush1.msra.mxu0 %v810
        %832 = vmatprep.subr.mxu0 0.0
        %833 = vmatpush1.msra.mxu0 %v809
        %834 = vmatprep.subr.mxu0 0.0
        %835 = vmatpush1.msra.mxu0 %v808
        %836 = vmatprep.subr.mxu0 0.0
        %837 = vmatpush1.msra.mxu0 %v807
        %838 = vmatprep.subr.mxu0 0.0
        %839 = vmatpush1.msra.mxu0 %v806
        %840 = vmatprep.subr.mxu0 0.0
        %841 = vmatpush1.msra.mxu0 %v805
        %842 = vmatprep.subr.mxu0 0.0
        %843 = vmatpush1.msra.mxu0 %v804
        %844 = vmatprep.subr.mxu0 0.0
        %845 = vmatpush1.msra.mxu0 %v803
        %846 = vmatprep.subr.mxu0 0.0
        %847 = vmatpush1.msra.mxu0 %v802
        %848 = vmatprep.subr.mxu0 0.0
        %849 = vmatpush1.msra.mxu0 %v801
        %850 = vmatprep.subr.mxu0 0.0
        %851 = vmatpush1.msra.mxu0 %v800
        %852 = vmatprep.subr.mxu0 0.0
        %853 = vmatpush1.msra.mxu0 %v799
        %854 = vmatprep.subr.mxu0 0.0
        %855 = vmatpush2.msra.mxu0 0.0
        %856 = vmatprep.subr.mxu0 0.0
        %857 = vmatpush2.msra.mxu0 0.0
        %858 = vmatprep.subr.mxu0 0.0
        %859 = vmatpush2.msra.mxu0 0.0
        %860 = vmatprep.subr.mxu0 0.0
        %861 = vmatpush2.msra.mxu0 0.0
        %862 = vmatprep.subr.mxu0 0.0
        %863 = vmatpush2.msra.mxu0 0.0
        %864 = vmatprep.subr.mxu0 0.0
        %865 = vmatpush2.msra.mxu0 0.0
        %866 = vmatprep.subr.mxu0 0.0
        %867 = vmatpush2.msra.mxu0 0.0
        %868 = vmatprep.subr.mxu0 0.0
        %869 = vmatpush2.msra.mxu0 0.0
        %870 = vmatprep.subr.mxu0 0.0
        %871 = vmatpush2.msra.mxu0 0.0
        %872 = vmatprep.subr.mxu0 0.0
        %873 = vmatpush2.msra.mxu0 0.0
        %874 = vmatprep.subr.mxu0 0.0
        %875 = vmatpush2.msra.mxu0 0.0
        %876 = vmatprep.subr.mxu0 0.0
        %877 = vmatpush2.msra.mxu0 0.0
        %878 = vmatprep.subr.mxu0 0.0
        %879 = vmatpush2.msra.mxu0 0.0
        %880 = vmatprep.subr.mxu0 0.0
        %881 = vmatpush2.msra.mxu0 0.0
        %882 = vmatprep.subr.mxu0 0.0
        %883 = vmatpush2.msra.mxu0 0.0
        %884 = vmatprep.subr.mxu0 0.0
        %885 = vmatpush2.msra.mxu0 0.0
        %886 = vmatprep.mubr.f32.mxu0 0.0
        %887 = vmatmul.mubr.f32.gmra.mxu0 %v817
        %v888 = vpop.f32.mrf.mxu0
        %v889 = vadd.f32 0.0, %v888
        %v890 = vpop.f32.mrf.mxu0
        %891 = vmatprep.mubr.f32.mxu0 0.0
        %892 = vmatmul.mubr.f32.gmra.mxu0 %v819
        %v893 = vpop.f32.mrf.mxu0
        %v894 = vadd.f32 0.0, %v893
        %v895 = vpop.f32.mrf.mxu0
        %896 = vdwg.mxu0
        %v897 = vadd.f32 %v790, %v889
        %v898 = vadd.f32 %v795, %v894
        %v899 = vld [vmem:[%s4] sm:$0x1]
        %v901 = vlaneseq
        %v902 = vshrl.u32 %v901, 7
        %v903 = vsub.s32 0, %v902
        %v904 = vrot.slane %v899, %v903
        %v906 = vadd.f32 %v897, %v904
        %v907 = vadd.f32 %v898, %v904
        %v908 = vadd.f32 %v906, %v481
        %v909 = vadd.f32 %v907, %v483
        %v910 = vtanh.pop %v908
        %v911 = vtanh.pop %v909
        %912 = vst [vmem:[%s247] sm:$0xff] %v910
        %913 = vst [vmem:[%s247 + $0x8] sm:$0xff] %v911
        %s914 = sand.u32 %s139, 1
        %s915 = scalar_lea.sflag [#allocation4], %s914
        %s916 = sand.u32 %s139, 1
        %s917 = smul.addr %s916, 16
        %s918 = scalar_lea.vmem [#allocation7], %s917
        // Predicated region
        $region49: #{tpu_custom_call.1} parent=39 // pred_check
          %p919 = pneg %p149
        $region50: #{tpu_custom_call.1} parent=39 // pred_check_branch
          %921 = sbr.rel (%p919) target = $region52
        $region51: #{tpu_custom_call.1} parent=39 // pred_region
          %s923 = ssub.s32 256, 256
          %924 = vsyncadd %s915, %s923
          %s925 = smul.addr %s21, 2
          %s926 = smul.addr %s925, 128
          %s927 = scalar_lea.hbm %s5, %s926
          %s928 = sshll.u32 %s918, 4
          %s929 = int_to_ptr.vmem [resolvable:$true] %s928
          %934 = dma.vmem_to_hbm [thread:$0]  %s929, 256, %s927, %s915, 128, 128, 8
        $region52: #{tpu_custom_call.1} parent=39 // pred_fallthru
          _
      $region40: #{tpu_custom_call.1} parent=5 // pred_fallthru
        _
      %p935 = scmp.le.s32.totalorder 2, %s16
      // Predicated region
      $region53: #{tpu_custom_call.1} parent=5 // pred_check
        %p936 = pneg %p935
      $region54: #{tpu_custom_call.1} parent=5 // pred_check_branch
        %938 = sbr.rel (%p936) target = $region56
      $region55: #{tpu_custom_call.1} parent=5 // pred_region
        %s939 = ssub.s32 %s16, 2
        // Predicated region
        $region57: #{tpu_custom_call.1} parent=55 // pred_check
          %p940 = pneg %p155
        $region58: #{tpu_custom_call.1} parent=55 // pred_check_branch
          %942 = sbr.rel (%p940) target = $region60
        $region59: #{tpu_custom_call.1} parent=55 // pred_region
          %s943 = sand.u32 %s140, 1
          %s944 = scalar_lea.sflag [#allocation4], %s943
          %s945 = sand.u32 %s140, 1
          %s946 = smul.addr %s945, 16
          %s947 = scalar_lea.vmem [#allocation7], %s946
          %948 = dma.done %s944, 256
        $region60: #{tpu_custom_call.1} parent=55 // pred_fallthru
          _
      $region56: #{tpu_custom_call.1} parent=5 // pred_fallthru
        _
    $region6: #{tpu_custom_call.1} parent=1 // loop_footer
      %s20 = sadd.s32 1, %s16
    $region7: #{tpu_custom_call.1} parent=1 // loop_footer_branch
      %15 = sbr.rel target = $region3
    $region8: #{tpu_custom_call.1} parent=1 // loop_exit
      _
    %949 = vsyncpa [#allocation3], 1
    %s950 = scalar_lea.sflag [#allocation3], 1
    %951 = vsyncpa %s950, 1
    %952 = vsyncpa [#allocation6], 1
    %953 = vsyncpa [#allocation4], 1
    %s954 = scalar_lea.sflag [#allocation4], 1
    %955 = vsyncpa %s954, 1

</llo_original>
